<compile_context>
chip_gen: v7x
topology: tpu7x:2x2x1
jax: 0.10.0
libtpu: 0.0.40
codegen_flags: <defaults>
</compile_context>

<pallas_src>
import math
import functools

import jax
import jax.numpy as jnp
from jax import lax
from jax.experimental import pallas as pl
from jax.experimental.pallas import tpu as pltpu


# ----------------------------- Pallas kernel ------------------------------ #

def _fused_attn_block_kernel(hm_flags_ref,                       # SMEM (H,) int32 (scalar prefetch)
                             h_ref, am_ref, hml_ref,
                             wq_ref, bq_ref, wk_ref, bk_ref,
                             wv_ref, bv_ref, wo_ref, bo_ref,
                             o_ref,
                             ctx_ref, *,
                             num_heads, head_dim, scale):
    # h block: (1, S, hidden); attn-mask block: (1, 1, S); head-mask lane vec: (1, hidden)
    # weights: (hidden, hidden); biases: (1, hidden); ctx scratch: (S, hidden) f32
    S = h_ref.shape[1]

    h = h_ref[0]                                     # (S, hidden) f32
    h_bf = h.astype(jnp.bfloat16)

    # Fused Q/K/V projections: full 128-wide contractions on the MXU, f32 accumulation.
    q = jnp.dot(h_bf, wq_ref[...].astype(jnp.bfloat16),
                preferred_element_type=jnp.float32) + bq_ref[...]
    k = jnp.dot(h_bf, wk_ref[...].astype(jnp.bfloat16),
                preferred_element_type=jnp.float32) + bk_ref[...]
    v = jnp.dot(h_bf, wv_ref[...].astype(jnp.bfloat16),
                preferred_element_type=jnp.float32) + bv_ref[...]

    mask = am_ref[0].astype(jnp.float32)             # (1, S) in {0,1}
    bias = (1.0 - mask) * -1e9                       # additive key bias, broadcast over queries

    # Hoisted once on full lane-width rows (not per head).
    qf = (q * scale).astype(jnp.bfloat16)            # (S, hidden) bf16 MXU operand
    kf = k.astype(jnp.bfloat16)
    vf = v.astype(jnp.bfloat16)

    for head in range(num_heads):                    # static loop; each iter writes scratch
        sl = slice(head * head_dim, (head + 1) * head_dim)

        @pl.when(hm_flags_ref[head] != 0)            # skip fully-masked heads (SHAP search)
        def _(sl=sl):
            qh = qf[:, sl]                           # (S, D)
            kh = kf[:, sl]
            vh = vf[:, sl]
            # contract over D without an explicit K transpose
            scores = lax.dot_general(
                qh, kh, dimension_numbers=(((1,), (1,)), ((), ())),
                preferred_element_type=jnp.float32) + bias        # (S, S) f32
            scores = scores - scores.max(axis=-1, keepdims=True)
            p = jnp.exp(scores)                                    # f32 softmax math
            denom = p.sum(axis=-1, keepdims=True)                  # (S, 1)
            ctx_h = jnp.dot(p.astype(jnp.bfloat16), vh,
                            preferred_element_type=jnp.float32)    # (S, D) f32
            # fold normalization into the (S, D) context (EUP approx reciprocal)
            ctx_ref[:, sl] = ctx_h * pl.reciprocal(denom, approx=True)

        @pl.when(hm_flags_ref[head] == 0)
        def _(sl=sl):
            ctx_ref[:, sl] = jnp.zeros((S, head_dim), jnp.float32)

    # One lane-dense head-mask multiply (HF "mask * attention_probs" semantics; the mask
    # is constant per head so scaling the context is mathematically identical), then the
    # fused output projection and residual add.
    ctx = ctx_ref[...] * hml_ref[...]                # (S, hidden) * (1, hidden)
    attn_out = jnp.dot(ctx.astype(jnp.bfloat16), wo_ref[...].astype(jnp.bfloat16),
                       preferred_element_type=jnp.float32) + bo_ref[...]
    o_ref[0] = (h + attn_out).astype(o_ref.dtype)    # lane-dense (S, hidden) store


def fused_head_masked_attention_block(h, attention_mask, head_mask,
                                       wq, bq, wk, bk, wv, bv, wo, bo, num_heads):
    """Fused: Q/K/V projections + head-masked attention + Wo projection + residual.

    h: (B, S, hidden) f32 embeddings; attention_mask: (B, S) in {0,1}; head_mask: (H,).
    Returns (B, S, hidden) = h + Attention(h) @ Wo  (pre-layernorm hidden states).
    """
    B, S, hidden = h.shape
    assert hidden % num_heads == 0
    D = hidden // num_heads
    scale = 1.0 / math.sqrt(D)

    am = attention_mask.astype(jnp.float32).reshape(B, 1, S)
    hm_f32 = head_mask.astype(jnp.float32)
    hm_flags = (hm_f32 != 0.0).astype(jnp.int32)             # SMEM prefetch: head-skip flags
    hm_lane = jnp.repeat(hm_f32, D).reshape(1, hidden)       # lane-expanded mask values

    def b2(x):
        return x.reshape(1, hidden)

    hs_spec = pl.BlockSpec((1, S, hidden), lambda b, hm: (b, 0, 0))
    w_spec = pl.BlockSpec((hidden, hidden), lambda b, hm: (0, 0))
    vec_spec = pl.BlockSpec((1, hidden), lambda b, hm: (0, 0))

    # Advisory cost estimate so XLA can overlap neighbours with the custom call.
    flops = (4 * 2 * B * S * hidden * hidden            # q/k/v/o projections
             + 2 * 2 * B * num_heads * S * S * D)        # scores + p@v
    bytes_accessed = (2 * B * S * hidden * 4             # h in + out
                      + 4 * hidden * hidden * 4          # weights
                      + 5 * hidden * 4 + B * S * 4)      # biases, head-mask, attn-mask
    cost = pl.CostEstimate(flops=flops,
                           transcendentals=B * num_heads * S * S,
                           bytes_accessed=bytes_accessed)

    out = pl.pallas_call(
        functools.partial(_fused_attn_block_kernel,
                          num_heads=num_heads, head_dim=D, scale=scale),
        out_shape=jax.ShapeDtypeStruct((B, S, hidden), h.dtype),
        grid_spec=pltpu.PrefetchScalarGridSpec(
            num_scalar_prefetch=1,                       # head-skip flags -> SMEM
            grid=(B,),
            in_specs=[
                hs_spec,                                             # h (lane-dense)
                pl.BlockSpec((1, 1, S), lambda b, hm: (b, 0, 0)),    # attention mask
                vec_spec,                                            # head mask (lane vec)
                w_spec, vec_spec,                                    # wq, bq
                w_spec, vec_spec,                                    # wk, bk
                w_spec, vec_spec,                                    # wv, bv
                w_spec, vec_spec,                                    # wo, bo
            ],
            out_specs=hs_spec,                                       # lane-dense output slab
            scratch_shapes=[pltpu.VMEM((S, hidden), jnp.float32)],   # per-step ctx scratch
        ),
        compiler_params=pltpu.CompilerParams(dimension_semantics=("parallel",)),
        cost_estimate=cost,
    )(hm_flags, h, am, hm_lane, wq, b2(bq), wk, b2(bk), wv, b2(bv), wo, b2(bo))
    return out


# --------------------------- minimal "real model" -------------------------- #

class MiniTokenClassifier:
    """Single-layer BERT-style token classifier (the `real_model` MaskModel wraps)."""

    def __init__(self, key, vocab_size, hidden, num_heads, num_labels):
        assert hidden % num_heads == 0
        self.H = num_heads
        self.D = hidden // num_heads
        self.hidden = hidden
        self.num_labels = num_labels
        ks = jax.random.split(key, 6)
        s = 0.02
        self.emb = jax.random.normal(ks[0], (vocab_size, hidden), jnp.float32) * s
        self.wq = jax.random.normal(ks[1], (hidden, hidden), jnp.float32) * s
        self.wk = jax.random.normal(ks[2], (hidden, hidden), jnp.float32) * s
        self.wv = jax.random.normal(ks[3], (hidden, hidden), jnp.float32) * s
        self.wo = jax.random.normal(ks[4], (hidden, hidden), jnp.float32) * s
        self.wc = jax.random.normal(ks[5], (hidden, num_labels), jnp.float32) * s
        self.bq = jnp.zeros((hidden,), jnp.float32)
        self.bk = jnp.zeros((hidden,), jnp.float32)
        self.bv = jnp.zeros((hidden,), jnp.float32)
        self.bo = jnp.zeros((hidden,), jnp.float32)
        self.bc = jnp.zeros((num_labels,), jnp.float32)

    def forward(self, input_ids=None, attention_mask=None, labels=None, head_mask=None):
        B, S = input_ids.shape
        if attention_mask is None:
            attention_mask = jnp.ones((B, S), jnp.float32)
        if head_mask is None:
            head_mask = jnp.ones((self.H,), jnp.float32)

        h = self.emb[input_ids]                                   # (B, S, hidden)

        # Fused Pallas block: Q/K/V proj -> head-masked attention -> Wo proj -> residual.
        x = fused_head_masked_attention_block(
            h, attention_mask, head_mask,
            self.wq, self.bq, self.wk, self.bk, self.wv, self.bv,
            self.wo, self.bo, self.H)                             # (B, S, hidden)

        mu = x.mean(-1, keepdims=True)
        var = x.var(-1, keepdims=True)
        x = (x - mu) * jax.lax.rsqrt(var + 1e-12)                 # layernorm (no affine)

        logits = x @ self.wc + self.bc                            # (B, S, num_labels)

        loss = None
        if labels is not None:
            logp = jax.nn.log_softmax(logits, axis=-1)
            picked = jnp.take_along_axis(logp, labels[..., None], axis=-1)[..., 0]
            m = attention_mask.astype(jnp.float32)
            loss = -(picked * m).sum() / jnp.maximum(m.sum(), 1.0)

        return loss, logits


class MaskModel:
    """JAX mirror of shap_udpos.MaskModel: forward delegates with stored head_mask."""

    def __init__(self, real_model, head_mask, lang):
        self.real_model = real_model
        self.head_mask = head_mask
        self.lang = lang
        # TODO(synk): host-side bookkeeping (tracker file I/O, bernstein bounds, contribution
        # arrays) is pure Python/NumPy side-effect logic, not device compute — omitted.

    def set_mask(self, mask):
        self.head_mask = mask

    def forward(self, input_ids=None, attention_mask=None, labels=None):
        return self.real_model.forward(
            input_ids=input_ids,
            attention_mask=attention_mask,
            labels=labels,
            head_mask=self.head_mask,
        )


# --------------------------- pure-JAX reference ----------------------------- #

def _reference_logits(m, input_ids, attention_mask, head_mask):
    """f32, exact-softmax reference of the same forward (for a loose sanity check)."""
    B, S = input_ids.shape
    H, D, hidden = m.H, m.D, m.hidden
    h = m.emb[input_ids]
    q = h @ m.wq + m.bq
    k = h @ m.wk + m.bk
    v = h @ m.wv + m.bv

    def split(x):
        return x.reshape(B, S, H, D).transpose(0, 2, 1, 3)        # (B, H, S, D)

    qh, kh, vh = split(q), split(k), split(v)
    scores = jnp.einsum("bhqd,bhkd->bhqk", qh, kh) / math.sqrt(D)
    bias = (1.0 - attention_mask.astype(jnp.float32))[:, None, None, :] * -1e9
    probs = jax.nn.softmax(scores + bias, axis=-1)
    probs = probs * head_mask[None, :, None, None]                # HF head_mask semantics
    ctx = jnp.einsum("bhqk,bhkd->bhqd", probs, vh)
    ctx = ctx.transpose(0, 2, 1, 3).reshape(B, S, hidden)
    x = h + (ctx @ m.wo + m.bo)
    mu = x.mean(-1, keepdims=True)
    var = x.var(-1, keepdims=True)
    x = (x - mu) * jax.lax.rsqrt(var + 1e-12)
    return x @ m.wc + m.bc


# --------------------------------- main ------------------------------------ #

if __name__ == "__main__":
    key = jax.random.PRNGKey(0)
    k_model, k_ids, k_lab = jax.random.split(key, 3)

    B, S = 2, 8
    vocab, hidden, heads, num_labels = 50, 128, 4, 18

    real_model = MiniTokenClassifier(k_model, vocab, hidden, heads, num_labels)

    # Mask out one attention head (what the SHAP search does per step).
    head_mask = jnp.ones((heads,), jnp.float32).at[1].set(0.0)
    model = MaskModel(real_model, head_mask, lang="en")

    input_ids = jax.random.randint(k_ids, (B, S), 0, vocab, dtype=jnp.int32)
    attention_mask = jnp.ones((B, S), jnp.float32).at[1, 6:].set(0.0)  # pad tail of seq 1
    labels = jax.random.randint(k_lab, (B, S), 0, num_labels, dtype=jnp.int32)

    loss, logits = model.forward(input_ids=input_ids, attention_mask=attention_mask, labels=labels)
    jax.block_until_ready((loss, logits))

    assert logits.shape == (B, S, num_labels)
    assert jnp.isfinite(loss)

    # Loose wiring check vs. the f32 reference (bf16 MXU + approx reciprocal => small drift).
    ref = _reference_logits(real_model, input_ids, attention_mask, head_mask)
    max_diff = float(jnp.max(jnp.abs(logits - ref)))
    assert jnp.isfinite(max_diff) and max_diff < 0.1, f"max |diff| too large: {max_diff}"

    print("KERNEL_OK")
</pallas_src>

<mosaic_0001>
module attributes {stable_mosaic.version = 11 : i64} {
  func.func @_fused_attn_block_kernel(%arg0: i32, %arg1: memref<4xi32, #tpu.memory_space<smem>>, %arg2: memref<1x8x128xf32, #tpu.memory_space<vmem>>, %arg3: memref<1x1x8xf32, #tpu.memory_space<vmem>>, %arg4: memref<1x128xf32, #tpu.memory_space<vmem>>, %arg5: memref<128x128xf32, #tpu.memory_space<vmem>>, %arg6: memref<1x128xf32, #tpu.memory_space<vmem>>, %arg7: memref<128x128xf32, #tpu.memory_space<vmem>>, %arg8: memref<1x128xf32, #tpu.memory_space<vmem>>, %arg9: memref<128x128xf32, #tpu.memory_space<vmem>>, %arg10: memref<1x128xf32, #tpu.memory_space<vmem>>, %arg11: memref<128x128xf32, #tpu.memory_space<vmem>>, %arg12: memref<1x128xf32, #tpu.memory_space<vmem>>, %arg13: memref<1x8x128xf32, #tpu.memory_space<vmem>>, %arg14: memref<8x128xf32, #tpu.memory_space<vmem>>) attributes {dimension_semantics = [#tpu.dimension_semantics<parallel>], iteration_bounds = array<i64: 2>, scalar_prefetch = 1 : i64, scratch_operands = 1 : i64, tpu.core_type = #tpu.core_type<tc>, window_params = [{transform_indices = @transform_0, window_bounds = array<i64: 1, 8, 128>}, {transform_indices = @transform_1, window_bounds = array<i64: 1, 1, 8>}, {pipeline_mode = #tpu.pipeline_mode<synchronous>, transform_indices = @transform_2, window_bounds = array<i64: 1, 128>}, {pipeline_mode = #tpu.pipeline_mode<synchronous>, transform_indices = @transform_3, window_bounds = array<i64: 128, 128>}, {pipeline_mode = #tpu.pipeline_mode<synchronous>, transform_indices = @transform_4, window_bounds = array<i64: 1, 128>}, {pipeline_mode = #tpu.pipeline_mode<synchronous>, transform_indices = @transform_5, window_bounds = array<i64: 128, 128>}, {pipeline_mode = #tpu.pipeline_mode<synchronous>, transform_indices = @transform_6, window_bounds = array<i64: 1, 128>}, {pipeline_mode = #tpu.pipeline_mode<synchronous>, transform_indices = @transform_7, window_bounds = array<i64: 128, 128>}, {pipeline_mode = #tpu.pipeline_mode<synchronous>, transform_indices = @transform_8, window_bounds = array<i64: 1, 128>}, {pipeline_mode = #tpu.pipeline_mode<synchronous>, transform_indices = @transform_9, window_bounds = array<i64: 128, 128>}, {pipeline_mode = #tpu.pipeline_mode<synchronous>, transform_indices = @transform_10, window_bounds = array<i64: 1, 128>}, {transform_indices = @transform_11, window_bounds = array<i64: 1, 8, 128>}]} {
    %c0 = arith.constant 0 : index
    %c0_0 = arith.constant 0 : index
    %c0_1 = arith.constant 0 : index
    %0 = vector.load %arg2[%c0, %c0_0, %c0_1] : memref<1x8x128xf32, #tpu.memory_space<vmem>>, vector<1x8x128xf32>
    %1 = vector.shape_cast %0 : vector<1x8x128xf32> to vector<8x128xf32>
    %2 = arith.truncf %1 : vector<8x128xf32> to vector<8x128xbf16>
    %c0_2 = arith.constant 0 : index
    %c0_3 = arith.constant 0 : index
    %3 = vector.load %arg5[%c0_2, %c0_3] : memref<128x128xf32, #tpu.memory_space<vmem>>, vector<128x128xf32>
    %4 = arith.truncf %3 : vector<128x128xf32> to vector<128x128xbf16>
    %cst = arith.constant dense<0.000000e+00> : vector<8x128xf32>
    %5 = tpu.matmul %2, %4, %cst {dimension_numbers = #tpu.dot_dimension_numbers<[1], [0], [0], [1], [0, 0, 1, 1], [], []>} : vector<8x128xbf16>, vector<128x128xbf16>, vector<8x128xf32> -> vector<8x128xf32>
    %c0_4 = arith.constant 0 : index
    %c0_5 = arith.constant 0 : index
    %6 = vector.load %arg6[%c0_4, %c0_5] : memref<1x128xf32, #tpu.memory_space<vmem>>, vector<1x128xf32>
    %7 = vector.broadcast %6 : vector<1x128xf32> to vector<8x128xf32>
    %8 = arith.addf %5, %7 : vector<8x128xf32>
    %c0_6 = arith.constant 0 : index
    %c0_7 = arith.constant 0 : index
    %9 = vector.load %arg7[%c0_6, %c0_7] : memref<128x128xf32, #tpu.memory_space<vmem>>, vector<128x128xf32>
    %10 = arith.truncf %9 : vector<128x128xf32> to vector<128x128xbf16>
    %cst_8 = arith.constant dense<0.000000e+00> : vector<8x128xf32>
    %11 = tpu.matmul %2, %10, %cst_8 {dimension_numbers = #tpu.dot_dimension_numbers<[1], [0], [0], [1], [0, 0, 1, 1], [], []>} : vector<8x128xbf16>, vector<128x128xbf16>, vector<8x128xf32> -> vector<8x128xf32>
    %c0_9 = arith.constant 0 : index
    %c0_10 = arith.constant 0 : index
    %12 = vector.load %arg8[%c0_9, %c0_10] : memref<1x128xf32, #tpu.memory_space<vmem>>, vector<1x128xf32>
    %13 = vector.broadcast %12 : vector<1x128xf32> to vector<8x128xf32>
    %14 = arith.addf %11, %13 : vector<8x128xf32>
    %c0_11 = arith.constant 0 : index
    %c0_12 = arith.constant 0 : index
    %15 = vector.load %arg9[%c0_11, %c0_12] : memref<128x128xf32, #tpu.memory_space<vmem>>, vector<128x128xf32>
    %16 = arith.truncf %15 : vector<128x128xf32> to vector<128x128xbf16>
    %cst_13 = arith.constant dense<0.000000e+00> : vector<8x128xf32>
    %17 = tpu.matmul %2, %16, %cst_13 {dimension_numbers = #tpu.dot_dimension_numbers<[1], [0], [0], [1], [0, 0, 1, 1], [], []>} : vector<8x128xbf16>, vector<128x128xbf16>, vector<8x128xf32> -> vector<8x128xf32>
    %c0_14 = arith.constant 0 : index
    %c0_15 = arith.constant 0 : index
    %18 = vector.load %arg10[%c0_14, %c0_15] : memref<1x128xf32, #tpu.memory_space<vmem>>, vector<1x128xf32>
    %19 = vector.broadcast %18 : vector<1x128xf32> to vector<8x128xf32>
    %20 = arith.addf %17, %19 : vector<8x128xf32>
    %c0_16 = arith.constant 0 : index
    %c0_17 = arith.constant 0 : index
    %c0_18 = arith.constant 0 : index
    %21 = vector.load %arg3[%c0_16, %c0_17, %c0_18] : memref<1x1x8xf32, #tpu.memory_space<vmem>>, vector<1x1x8xf32>
    %22 = vector.shape_cast %21 : vector<1x1x8xf32> to vector<1x8xf32>
    %cst_19 = arith.constant 1.000000e+00 : f32
    %23 = vector.broadcast %cst_19 : f32 to vector<1x8xf32>
    %24 = arith.subf %23, %22 : vector<1x8xf32>
    %cst_20 = arith.constant -1.000000e+09 : f32
    %25 = vector.broadcast %cst_20 : f32 to vector<1x8xf32>
    %26 = arith.mulf %24, %25 : vector<1x8xf32>
    %cst_21 = arith.constant 0.176776692 : f32
    %27 = vector.broadcast %cst_21 : f32 to vector<8x128xf32>
    %28 = arith.mulf %8, %27 : vector<8x128xf32>
    %29 = arith.truncf %28 : vector<8x128xf32> to vector<8x128xbf16>
    %30 = arith.truncf %14 : vector<8x128xf32> to vector<8x128xbf16>
    %31 = arith.truncf %20 : vector<8x128xf32> to vector<8x128xbf16>
    %c0_22 = arith.constant 0 : index
    %32 = memref.load %arg1[%c0_22] : memref<4xi32, #tpu.memory_space<smem>>
    %c0_i32 = arith.constant 0 : i32
    %33 = arith.cmpi ne, %32, %c0_i32 : i32
    %34 = arith.extui %33 : i1 to i32
    %c0_i32_23 = arith.constant 0 : i32
    %35 = arith.cmpi ne, %34, %c0_i32_23 : i32
    scf.if %35 {
      %79 = vector.extract_strided_slice %29 {offsets = [0, 0], sizes = [8, 32], strides = [1, 1]} : vector<8x128xbf16> to vector<8x32xbf16>
      %80 = vector.extract_strided_slice %30 {offsets = [0, 0], sizes = [8, 32], strides = [1, 1]} : vector<8x128xbf16> to vector<8x32xbf16>
      %81 = vector.extract_strided_slice %31 {offsets = [0, 0], sizes = [8, 32], strides = [1, 1]} : vector<8x128xbf16> to vector<8x32xbf16>
      %cst_54 = arith.constant dense<0.000000e+00> : vector<8x8xf32>
      %82 = tpu.matmul %79, %80, %cst_54 {dimension_numbers = #tpu.dot_dimension_numbers<[1], [1], [0], [0], [0, 0, 1, 0], [], []>} : vector<8x32xbf16>, vector<8x32xbf16>, vector<8x8xf32> -> vector<8x8xf32>
      %83 = vector.broadcast %26 : vector<1x8xf32> to vector<8x8xf32>
      %84 = arith.addf %82, %83 : vector<8x8xf32>
      %cst_55 = arith.constant dense<0xFF800000> : vector<8xf32>
      %85 = vector.multi_reduction <maximumf>, %84, %cst_55 [1] : vector<8x8xf32> to vector<8xf32>
      %86 = vector.shape_cast %85 : vector<8xf32> to vector<8x1xf32>
      %87 = vector.broadcast %86 : vector<8x1xf32> to vector<8x8xf32>
      %88 = arith.subf %84, %87 : vector<8x8xf32>
      %89 = math.exp %88 : vector<8x8xf32>
      %cst_56 = arith.constant dense<0.000000e+00> : vector<8xf32>
      %90 = vector.multi_reduction <add>, %89, %cst_56 [1] : vector<8x8xf32> to vector<8xf32>
      %91 = vector.shape_cast %90 : vector<8xf32> to vector<8x1xf32>
      %92 = arith.truncf %89 : vector<8x8xf32> to vector<8x8xbf16>
      %cst_57 = arith.constant dense<0.000000e+00> : vector<8x32xf32>
      %93 = tpu.matmul %92, %81, %cst_57 {dimension_numbers = #tpu.dot_dimension_numbers<[1], [0], [0], [1], [0, 0, 1, 1], [], []>} : vector<8x8xbf16>, vector<8x32xbf16>, vector<8x32xf32> -> vector<8x32xf32>
      %94 = tpu.reciprocal %91 {approx = true} : vector<8x1xf32> -> vector<8x1xf32>
      %95 = vector.broadcast %94 : vector<8x1xf32> to vector<8x32xf32>
      %96 = arith.mulf %93, %95 : vector<8x32xf32>
      %c0_58 = arith.constant 0 : index
      %c0_59 = arith.constant 0 : index
      %97 = vector.load %arg14[%c0_58, %c0_59] : memref<8x128xf32, #tpu.memory_space<vmem>>, vector<8x32xf32>
      tpu.vector_store %arg14[%c0_58, %c0_59], %96 {strides = array<i32>} : memref<8x128xf32, #tpu.memory_space<vmem>>, vector<8x32xf32>,
    } else {
    }
    %c0_24 = arith.constant 0 : index
    %36 = memref.load %arg1[%c0_24] : memref<4xi32, #tpu.memory_space<smem>>
    %c0_i32_25 = arith.constant 0 : i32
    %37 = arith.cmpi eq, %36, %c0_i32_25 : i32
    %38 = arith.extui %37 : i1 to i32
    %c0_i32_26 = arith.constant 0 : i32
    %39 = arith.cmpi ne, %38, %c0_i32_26 : i32
    scf.if %39 {
      %cst_54 = arith.constant 0.000000e+00 : f32
      %79 = vector.broadcast %cst_54 : f32 to vector<8x32xf32>
      %c0_55 = arith.constant 0 : index
      %c0_56 = arith.constant 0 : index
      %80 = vector.load %arg14[%c0_55, %c0_56] : memref<8x128xf32, #tpu.memory_space<vmem>>, vector<8x32xf32>
      tpu.vector_store %arg14[%c0_55, %c0_56], %79 {strides = array<i32>} : memref<8x128xf32, #tpu.memory_space<vmem>>, vector<8x32xf32>,
    } else {
    }
    %c1 = arith.constant 1 : index
    %40 = memref.load %arg1[%c1] : memref<4xi32, #tpu.memory_space<smem>>
    %c0_i32_27 = arith.constant 0 : i32
    %41 = arith.cmpi ne, %40, %c0_i32_27 : i32
    %42 = arith.extui %41 : i1 to i32
    %c0_i32_28 = arith.constant 0 : i32
    %43 = arith.cmpi ne, %42, %c0_i32_28 : i32
    scf.if %43 {
      %79 = vector.extract_strided_slice %29 {offsets = [0, 32], sizes = [8, 32], strides = [1, 1]} : vector<8x128xbf16> to vector<8x32xbf16>
      %80 = vector.extract_strided_slice %30 {offsets = [0, 32], sizes = [8, 32], strides = [1, 1]} : vector<8x128xbf16> to vector<8x32xbf16>
      %81 = vector.extract_strided_slice %31 {offsets = [0, 32], sizes = [8, 32], strides = [1, 1]} : vector<8x128xbf16> to vector<8x32xbf16>
      %cst_54 = arith.constant dense<0.000000e+00> : vector<8x8xf32>
      %82 = tpu.matmul %79, %80, %cst_54 {dimension_numbers = #tpu.dot_dimension_numbers<[1], [1], [0], [0], [0, 0, 1, 0], [], []>} : vector<8x32xbf16>, vector<8x32xbf16>, vector<8x8xf32> -> vector<8x8xf32>
      %83 = vector.broadcast %26 : vector<1x8xf32> to vector<8x8xf32>
      %84 = arith.addf %82, %83 : vector<8x8xf32>
      %cst_55 = arith.constant dense<0xFF800000> : vector<8xf32>
      %85 = vector.multi_reduction <maximumf>, %84, %cst_55 [1] : vector<8x8xf32> to vector<8xf32>
      %86 = vector.shape_cast %85 : vector<8xf32> to vector<8x1xf32>
      %87 = vector.broadcast %86 : vector<8x1xf32> to vector<8x8xf32>
      %88 = arith.subf %84, %87 : vector<8x8xf32>
      %89 = math.exp %88 : vector<8x8xf32>
      %cst_56 = arith.constant dense<0.000000e+00> : vector<8xf32>
      %90 = vector.multi_reduction <add>, %89, %cst_56 [1] : vector<8x8xf32> to vector<8xf32>
      %91 = vector.shape_cast %90 : vector<8xf32> to vector<8x1xf32>
      %92 = arith.truncf %89 : vector<8x8xf32> to vector<8x8xbf16>
      %cst_57 = arith.constant dense<0.000000e+00> : vector<8x32xf32>
      %93 = tpu.matmul %92, %81, %cst_57 {dimension_numbers = #tpu.dot_dimension_numbers<[1], [0], [0], [1], [0, 0, 1, 1], [], []>} : vector<8x8xbf16>, vector<8x32xbf16>, vector<8x32xf32> -> vector<8x32xf32>
      %94 = tpu.reciprocal %91 {approx = true} : vector<8x1xf32> -> vector<8x1xf32>
      %95 = vector.broadcast %94 : vector<8x1xf32> to vector<8x32xf32>
      %96 = arith.mulf %93, %95 : vector<8x32xf32>
      %c0_58 = arith.constant 0 : index
      %c32 = arith.constant 32 : index
      %97 = vector.load %arg14[%c0_58, %c32] : memref<8x128xf32, #tpu.memory_space<vmem>>, vector<8x32xf32>
      tpu.vector_store %arg14[%c0_58, %c32], %96 {strides = array<i32>} : memref<8x128xf32, #tpu.memory_space<vmem>>, vector<8x32xf32>,
    } else {
    }
    %c1_29 = arith.constant 1 : index
    %44 = memref.load %arg1[%c1_29] : memref<4xi32, #tpu.memory_space<smem>>
    %c0_i32_30 = arith.constant 0 : i32
    %45 = arith.cmpi eq, %44, %c0_i32_30 : i32
    %46 = arith.extui %45 : i1 to i32
    %c0_i32_31 = arith.constant 0 : i32
    %47 = arith.cmpi ne, %46, %c0_i32_31 : i32
    scf.if %47 {
      %cst_54 = arith.constant 0.000000e+00 : f32
      %79 = vector.broadcast %cst_54 : f32 to vector<8x32xf32>
      %c0_55 = arith.constant 0 : index
      %c32 = arith.constant 32 : index
      %80 = vector.load %arg14[%c0_55, %c32] : memref<8x128xf32, #tpu.memory_space<vmem>>, vector<8x32xf32>
      tpu.vector_store %arg14[%c0_55, %c32], %79 {strides = array<i32>} : memref<8x128xf32, #tpu.memory_space<vmem>>, vector<8x32xf32>,
    } else {
    }
    %c2 = arith.constant 2 : index
    %48 = memref.load %arg1[%c2] : memref<4xi32, #tpu.memory_space<smem>>
    %c0_i32_32 = arith.constant 0 : i32
    %49 = arith.cmpi ne, %48, %c0_i32_32 : i32
    %50 = arith.extui %49 : i1 to i32
    %c0_i32_33 = arith.constant 0 : i32
    %51 = arith.cmpi ne, %50, %c0_i32_33 : i32
    scf.if %51 {
      %79 = vector.extract_strided_slice %29 {offsets = [0, 64], sizes = [8, 32], strides = [1, 1]} : vector<8x128xbf16> to vector<8x32xbf16>
      %80 = vector.extract_strided_slice %30 {offsets = [0, 64], sizes = [8, 32], strides = [1, 1]} : vector<8x128xbf16> to vector<8x32xbf16>
      %81 = vector.extract_strided_slice %31 {offsets = [0, 64], sizes = [8, 32], strides = [1, 1]} : vector<8x128xbf16> to vector<8x32xbf16>
      %cst_54 = arith.constant dense<0.000000e+00> : vector<8x8xf32>
      %82 = tpu.matmul %79, %80, %cst_54 {dimension_numbers = #tpu.dot_dimension_numbers<[1], [1], [0], [0], [0, 0, 1, 0], [], []>} : vector<8x32xbf16>, vector<8x32xbf16>, vector<8x8xf32> -> vector<8x8xf32>
      %83 = vector.broadcast %26 : vector<1x8xf32> to vector<8x8xf32>
      %84 = arith.addf %82, %83 : vector<8x8xf32>
      %cst_55 = arith.constant dense<0xFF800000> : vector<8xf32>
      %85 = vector.multi_reduction <maximumf>, %84, %cst_55 [1] : vector<8x8xf32> to vector<8xf32>
      %86 = vector.shape_cast %85 : vector<8xf32> to vector<8x1xf32>
      %87 = vector.broadcast %86 : vector<8x1xf32> to vector<8x8xf32>
      %88 = arith.subf %84, %87 : vector<8x8xf32>
      %89 = math.exp %88 : vector<8x8xf32>
      %cst_56 = arith.constant dense<0.000000e+00> : vector<8xf32>
      %90 = vector.multi_reduction <add>, %89, %cst_56 [1] : vector<8x8xf32> to vector<8xf32>
      %91 = vector.shape_cast %90 : vector<8xf32> to vector<8x1xf32>
      %92 = arith.truncf %89 : vector<8x8xf32> to vector<8x8xbf16>
      %cst_57 = arith.constant dense<0.000000e+00> : vector<8x32xf32>
      %93 = tpu.matmul %92, %81, %cst_57 {dimension_numbers = #tpu.dot_dimension_numbers<[1], [0], [0], [1], [0, 0, 1, 1], [], []>} : vector<8x8xbf16>, vector<8x32xbf16>, vector<8x32xf32> -> vector<8x32xf32>
      %94 = tpu.reciprocal %91 {approx = true} : vector<8x1xf32> -> vector<8x1xf32>
      %95 = vector.broadcast %94 : vector<8x1xf32> to vector<8x32xf32>
      %96 = arith.mulf %93, %95 : vector<8x32xf32>
      %c0_58 = arith.constant 0 : index
      %c64 = arith.constant 64 : index
      %97 = vector.load %arg14[%c0_58, %c64] : memref<8x128xf32, #tpu.memory_space<vmem>>, vector<8x32xf32>
      tpu.vector_store %arg14[%c0_58, %c64], %96 {strides = array<i32>} : memref<8x128xf32, #tpu.memory_space<vmem>>, vector<8x32xf32>,
    } else {
    }
    %c2_34 = arith.constant 2 : index
    %52 = memref.load %arg1[%c2_34] : memref<4xi32, #tpu.memory_space<smem>>
    %c0_i32_35 = arith.constant 0 : i32
    %53 = arith.cmpi eq, %52, %c0_i32_35 : i32
    %54 = arith.extui %53 : i1 to i32
    %c0_i32_36 = arith.constant 0 : i32
    %55 = arith.cmpi ne, %54, %c0_i32_36 : i32
    scf.if %55 {
      %cst_54 = arith.constant 0.000000e+00 : f32
      %79 = vector.broadcast %cst_54 : f32 to vector<8x32xf32>
      %c0_55 = arith.constant 0 : index
      %c64 = arith.constant 64 : index
      %80 = vector.load %arg14[%c0_55, %c64] : memref<8x128xf32, #tpu.memory_space<vmem>>, vector<8x32xf32>
      tpu.vector_store %arg14[%c0_55, %c64], %79 {strides = array<i32>} : memref<8x128xf32, #tpu.memory_space<vmem>>, vector<8x32xf32>,
    } else {
    }
    %c3 = arith.constant 3 : index
    %56 = memref.load %arg1[%c3] : memref<4xi32, #tpu.memory_space<smem>>
    %c0_i32_37 = arith.constant 0 : i32
    %57 = arith.cmpi ne, %56, %c0_i32_37 : i32
    %58 = arith.extui %57 : i1 to i32
    %c0_i32_38 = arith.constant 0 : i32
    %59 = arith.cmpi ne, %58, %c0_i32_38 : i32
    scf.if %59 {
      %79 = vector.extract_strided_slice %29 {offsets = [0, 96], sizes = [8, 32], strides = [1, 1]} : vector<8x128xbf16> to vector<8x32xbf16>
      %80 = vector.extract_strided_slice %30 {offsets = [0, 96], sizes = [8, 32], strides = [1, 1]} : vector<8x128xbf16> to vector<8x32xbf16>
      %81 = vector.extract_strided_slice %31 {offsets = [0, 96], sizes = [8, 32], strides = [1, 1]} : vector<8x128xbf16> to vector<8x32xbf16>
      %cst_54 = arith.constant dense<0.000000e+00> : vector<8x8xf32>
      %82 = tpu.matmul %79, %80, %cst_54 {dimension_numbers = #tpu.dot_dimension_numbers<[1], [1], [0], [0], [0, 0, 1, 0], [], []>} : vector<8x32xbf16>, vector<8x32xbf16>, vector<8x8xf32> -> vector<8x8xf32>
      %83 = vector.broadcast %26 : vector<1x8xf32> to vector<8x8xf32>
      %84 = arith.addf %82, %83 : vector<8x8xf32>
      %cst_55 = arith.constant dense<0xFF800000> : vector<8xf32>
      %85 = vector.multi_reduction <maximumf>, %84, %cst_55 [1] : vector<8x8xf32> to vector<8xf32>
      %86 = vector.shape_cast %85 : vector<8xf32> to vector<8x1xf32>
      %87 = vector.broadcast %86 : vector<8x1xf32> to vector<8x8xf32>
      %88 = arith.subf %84, %87 : vector<8x8xf32>
      %89 = math.exp %88 : vector<8x8xf32>
      %cst_56 = arith.constant dense<0.000000e+00> : vector<8xf32>
      %90 = vector.multi_reduction <add>, %89, %cst_56 [1] : vector<8x8xf32> to vector<8xf32>
      %91 = vector.shape_cast %90 : vector<8xf32> to vector<8x1xf32>
      %92 = arith.truncf %89 : vector<8x8xf32> to vector<8x8xbf16>
      %cst_57 = arith.constant dense<0.000000e+00> : vector<8x32xf32>
      %93 = tpu.matmul %92, %81, %cst_57 {dimension_numbers = #tpu.dot_dimension_numbers<[1], [0], [0], [1], [0, 0, 1, 1], [], []>} : vector<8x8xbf16>, vector<8x32xbf16>, vector<8x32xf32> -> vector<8x32xf32>
      %94 = tpu.reciprocal %91 {approx = true} : vector<8x1xf32> -> vector<8x1xf32>
      %95 = vector.broadcast %94 : vector<8x1xf32> to vector<8x32xf32>
      %96 = arith.mulf %93, %95 : vector<8x32xf32>
      %c0_58 = arith.constant 0 : index
      %c96 = arith.constant 96 : index
      %97 = vector.load %arg14[%c0_58, %c96] : memref<8x128xf32, #tpu.memory_space<vmem>>, vector<8x32xf32>
      tpu.vector_store %arg14[%c0_58, %c96], %96 {strides = array<i32>} : memref<8x128xf32, #tpu.memory_space<vmem>>, vector<8x32xf32>,
    } else {
    }
    %c3_39 = arith.constant 3 : index
    %60 = memref.load %arg1[%c3_39] : memref<4xi32, #tpu.memory_space<smem>>
    %c0_i32_40 = arith.constant 0 : i32
    %61 = arith.cmpi eq, %60, %c0_i32_40 : i32
    %62 = arith.extui %61 : i1 to i32
    %c0_i32_41 = arith.constant 0 : i32
    %63 = arith.cmpi ne, %62, %c0_i32_41 : i32
    scf.if %63 {
      %cst_54 = arith.constant 0.000000e+00 : f32
      %79 = vector.broadcast %cst_54 : f32 to vector<8x32xf32>
      %c0_55 = arith.constant 0 : index
      %c96 = arith.constant 96 : index
      %80 = vector.load %arg14[%c0_55, %c96] : memref<8x128xf32, #tpu.memory_space<vmem>>, vector<8x32xf32>
      tpu.vector_store %arg14[%c0_55, %c96], %79 {strides = array<i32>} : memref<8x128xf32, #tpu.memory_space<vmem>>, vector<8x32xf32>,
    } else {
    }
    %c0_42 = arith.constant 0 : index
    %c0_43 = arith.constant 0 : index
    %64 = vector.load %arg14[%c0_42, %c0_43] : memref<8x128xf32, #tpu.memory_space<vmem>>, vector<8x128xf32>
    %c0_44 = arith.constant 0 : index
    %c0_45 = arith.constant 0 : index
    %65 = vector.load %arg4[%c0_44, %c0_45] : memref<1x128xf32, #tpu.memory_space<vmem>>, vector<1x128xf32>
    %66 = vector.broadcast %65 : vector<1x128xf32> to vector<8x128xf32>
    %67 = arith.mulf %64, %66 : vector<8x128xf32>
    %68 = arith.truncf %67 : vector<8x128xf32> to vector<8x128xbf16>
    %c0_46 = arith.constant 0 : index
    %c0_47 = arith.constant 0 : index
    %69 = vector.load %arg11[%c0_46, %c0_47] : memref<128x128xf32, #tpu.memory_space<vmem>>, vector<128x128xf32>
    %70 = arith.truncf %69 : vector<128x128xf32> to vector<128x128xbf16>
    %cst_48 = arith.constant dense<0.000000e+00> : vector<8x128xf32>
    %71 = tpu.matmul %68, %70, %cst_48 {dimension_numbers = #tpu.dot_dimension_numbers<[1], [0], [0], [1], [0, 0, 1, 1], [], []>} : vector<8x128xbf16>, vector<128x128xbf16>, vector<8x128xf32> -> vector<8x128xf32>
    %c0_49 = arith.constant 0 : index
    %c0_50 = arith.constant 0 : index
    %72 = vector.load %arg12[%c0_49, %c0_50] : memref<1x128xf32, #tpu.memory_space<vmem>>, vector<1x128xf32>
    %73 = vector.broadcast %72 : vector<1x128xf32> to vector<8x128xf32>
    %74 = arith.addf %71, %73 : vector<8x128xf32>
    %75 = arith.addf %1, %74 : vector<8x128xf32>
    %c0_51 = arith.constant 0 : index
    %c0_52 = arith.constant 0 : index
    %c0_53 = arith.constant 0 : index
    %76 = vector.load %arg13[%c0_51, %c0_52, %c0_53] : memref<1x8x128xf32, #tpu.memory_space<vmem>>, vector<1x8x128xf32>
    %77 = vector.shape_cast %76 : vector<1x8x128xf32> to vector<8x128xf32>
    %78 = vector.shape_cast %75 : vector<8x128xf32> to vector<1x8x128xf32>
    tpu.vector_store %arg13[%c0_51, %c0_52, %c0_53], %78 {strides = array<i32>} : memref<1x8x128xf32, #tpu.memory_space<vmem>>, vector<1x8x128xf32>,
    return
  }
  func.func @transform_0(%arg0: i32, %arg1: memref<4xi32, #tpu.memory_space<smem>>) -> (i32, i32, i32) {
    %c0_i32 = arith.constant 0 : i32
    %c0_i32_0 = arith.constant 0 : i32
    %c0_i32_1 = arith.constant 0 : i32
    return %arg0, %c0_i32, %c0_i32_0 : i32, i32, i32
  }
  func.func @transform_1(%arg0: i32, %arg1: memref<4xi32, #tpu.memory_space<smem>>) -> (i32, i32, i32) {
    %c0_i32 = arith.constant 0 : i32
    %c0_i32_0 = arith.constant 0 : i32
    %c0_i32_1 = arith.constant 0 : i32
    return %arg0, %c0_i32, %c0_i32_0 : i32, i32, i32
  }
  func.func @transform_2(%arg0: i32, %arg1: memref<4xi32, #tpu.memory_space<smem>>) -> (i32, i32) {
    %c0_i32 = arith.constant 0 : i32
    %c0_i32_0 = arith.constant 0 : i32
    %c0_i32_1 = arith.constant 0 : i32
    return %c0_i32, %c0_i32_0 : i32, i32
  }
  func.func @transform_3(%arg0: i32, %arg1: memref<4xi32, #tpu.memory_space<smem>>) -> (i32, i32) {
    %c0_i32 = arith.constant 0 : i32
    %c0_i32_0 = arith.constant 0 : i32
    %c0_i32_1 = arith.constant 0 : i32
    return %c0_i32, %c0_i32_0 : i32, i32
  }
  func.func @transform_4(%arg0: i32, %arg1: memref<4xi32, #tpu.memory_space<smem>>) -> (i32, i32) {
    %c0_i32 = arith.constant 0 : i32
    %c0_i32_0 = arith.constant 0 : i32
    %c0_i32_1 = arith.constant 0 : i32
    return %c0_i32, %c0_i32_0 : i32, i32
  }
  func.func @transform_5(%arg0: i32, %arg1: memref<4xi32, #tpu.memory_space<smem>>) -> (i32, i32) {
    %c0_i32 = arith.constant 0 : i32
    %c0_i32_0 = arith.constant 0 : i32
    %c0_i32_1 = arith.constant 0 : i32
    return %c0_i32, %c0_i32_0 : i32, i32
  }
  func.func @transform_6(%arg0: i32, %arg1: memref<4xi32, #tpu.memory_space<smem>>) -> (i32, i32) {
    %c0_i32 = arith.constant 0 : i32
    %c0_i32_0 = arith.constant 0 : i32
    %c0_i32_1 = arith.constant 0 : i32
    return %c0_i32, %c0_i32_0 : i32, i32
  }
  func.func @transform_7(%arg0: i32, %arg1: memref<4xi32, #tpu.memory_space<smem>>) -> (i32, i32) {
    %c0_i32 = arith.constant 0 : i32
    %c0_i32_0 = arith.constant 0 : i32
    %c0_i32_1 = arith.constant 0 : i32
    return %c0_i32, %c0_i32_0 : i32, i32
  }
  func.func @transform_8(%arg0: i32, %arg1: memref<4xi32, #tpu.memory_space<smem>>) -> (i32, i32) {
    %c0_i32 = arith.constant 0 : i32
    %c0_i32_0 = arith.constant 0 : i32
    %c0_i32_1 = arith.constant 0 : i32
    return %c0_i32, %c0_i32_0 : i32, i32
  }
  func.func @transform_9(%arg0: i32, %arg1: memref<4xi32, #tpu.memory_space<smem>>) -> (i32, i32) {
    %c0_i32 = arith.constant 0 : i32
    %c0_i32_0 = arith.constant 0 : i32
    %c0_i32_1 = arith.constant 0 : i32
    return %c0_i32, %c0_i32_0 : i32, i32
  }
  func.func @transform_10(%arg0: i32, %arg1: memref<4xi32, #tpu.memory_space<smem>>) -> (i32, i32) {
    %c0_i32 = arith.constant 0 : i32
    %c0_i32_0 = arith.constant 0 : i32
    %c0_i32_1 = arith.constant 0 : i32
    return %c0_i32, %c0_i32_0 : i32, i32
  }
  func.func @transform_11(%arg0: i32, %arg1: memref<4xi32, #tpu.memory_space<smem>>) -> (i32, i32, i32) {
    %c0_i32 = arith.constant 0 : i32
    %c0_i32_0 = arith.constant 0 : i32
    %c0_i32_1 = arith.constant 0 : i32
    return %arg0, %c0_i32, %c0_i32_0 : i32, i32, i32
  }
}

</mosaic_0001>

<llo_original>
// kernel: tpu_custom_call.1
$region0: #{tpu_custom_call.1}
  #allocation0 [shape = 'u32[]', space=smem, size = 0x4, offset = 0x4, fixed_abs, tag = 'smem constant byte address 0x4 - core index']
  #allocation1 [shape = 'u32[144,128]{1,0:T(1,128)}', space=vmem, size = 0x12000, scoped, tag = 'internal scratch']
  #allocation2 [shape = 'f32[8,128]{1,0:T(8,128)}', space=vmem, size = 0x1000, scoped, tag = 'scratch operand']
  #allocation3 [shape = 's32[1]{0}', space=sflag, size = 0x4, scoped, tag = 'scoped memory for tpu_custom_call.1']
  #allocation4 [shape = 'u8[512]{0}', space=smem, size = 0x200, scoped, tag = 'prefetched SMEM operand 0']
  %s0 = inlined_call_operand.hbm [shape: s32[4], index: 0, kind: input, shape index: {}]
  %s1 = inlined_call_operand.hbm [shape: f32[2,8,128], index: 1, kind: input, shape index: {}]
  %s2 = inlined_call_operand.vmem [shape: f32[2,1,8], index: 2, kind: input, shape index: {}]
  %s3 = inlined_call_operand.vmem [shape: f32[1,128], index: 3, kind: input, shape index: {}]
  %s4 = inlined_call_operand.hbm [shape: f32[128,128], index: 4, kind: input, shape index: {}]
  %s5 = inlined_call_operand.vmem [shape: f32[1,128], index: 5, kind: input, shape index: {}]
  %s6 = inlined_call_operand.hbm [shape: f32[128,128], index: 6, kind: input, shape index: {}]
  %s7 = inlined_call_operand.vmem [shape: f32[1,128], index: 7, kind: input, shape index: {}]
  %s8 = inlined_call_operand.hbm [shape: f32[128,128], index: 8, kind: input, shape index: {}]
  %s9 = inlined_call_operand.vmem [shape: f32[1,128], index: 9, kind: input, shape index: {}]
  %s10 = inlined_call_operand.hbm [shape: f32[128,128], index: 10, kind: input, shape index: {}]
  %s11 = inlined_call_operand.vmem [shape: f32[1,128], index: 11, kind: input, shape index: {}]
  %s12 = inlined_call_operand.hbm [shape: f32[2,8,128], index: 12, kind: output, shape index: {}]
  %s13 = sld [smem:[#allocation0]]
  $region129: #{tpu_custom_call.1} parent=0
    _
  %s15 = ssub.s32 1, %s13
  %s16 = scalar_select 0, %s15, %s13
  %18 = dma.hbm_to_smem %s0, 16, [#allocation4], [#allocation3]
  %19 = dma.done [#allocation3], 16
  %20 = sfence
  $region1: #{tpu_custom_call.1} parent=0
    #allocation5 [shape = 'u8[8192]{0}', space=vmem, size = 0x2000, scoped, tag = 'input window, operand 1']
    #allocation6 [shape = 's32[2]{0}', space=sflag, size = 0x8, scoped, tag = 'scoped memory for tpu_custom_call.1']
    #allocation7 [shape = 's32[2]{0}', space=sflag, size = 0x8, scoped, tag = 'scoped memory for tpu_custom_call.1']
    #allocation8 [shape = 'u8[65536]{0}', space=vmem, size = 0x10000, scoped, tag = 'input window, operand 4, single buffered']
    #allocation9 [shape = 's32[1]{0}', space=sflag, size = 0x4, scoped, tag = 'scoped memory for tpu_custom_call.1']
    #allocation10 [shape = 'u8[65536]{0}', space=vmem, size = 0x10000, scoped, tag = 'input window, operand 6, single buffered']
    #allocation11 [shape = 'u8[65536]{0}', space=vmem, size = 0x10000, scoped, tag = 'input window, operand 8, single buffered']
    #allocation12 [shape = 's32[1]{0}', space=sflag, size = 0x4, scoped, tag = 'scoped memory for tpu_custom_call.1']
    #allocation13 [shape = 'u8[65536]{0}', space=vmem, size = 0x10000, scoped, tag = 'input window, operand 10, single buffered']
    #allocation14 [shape = 'u8[8192]{0}', space=vmem, size = 0x2000, scoped, tag = 'output window, operand 0']
    %21 = vsyncpa [#allocation6], 0
    %s22 = scalar_lea.sflag [#allocation6], 1
    %23 = vsyncpa %s22, 0
    %24 = vsyncpa [#allocation9], 0
    %25 = vsyncpa [#allocation12], 0
    %26 = vsyncpa [#allocation7], 0
    %s27 = scalar_lea.sflag [#allocation7], 1
    %28 = vsyncpa %s27, 0
    loop: start=0, step=1, limit=4
    $region2: #{tpu_custom_call.1} parent=1 // loop_pre_header
      _
    $region3: #{tpu_custom_call.1} parent=1 // loop_header
      %s30 = sphi 0, %s34
      %p31 = scmp.ge.s32.totalorder %s30, 4
      %s40 = sphi 0, %s42
      %s43 = sphi 0, %s40
      %s44 = sphi 0, %s43
      %s60 = sphi 0, %s44
      %s66 = sphi 0, %s68
      %s69 = sphi 0, %s66
      %s70 = sphi 0, %s69
      %s86 = sphi 0, %s70
      %s90 = sphi 0, %s90
      %s92 = sphi 0, %s90
      %s93 = sphi 0, %s92
      %s107 = sphi 0, %s93
      %s111 = sphi 0, %s111
      %s113 = sphi 0, %s111
      %s114 = sphi 0, %s113
      %s128 = sphi 0, %s114
      %s132 = sphi 0, %s132
      %s134 = sphi 0, %s132
      %s135 = sphi 0, %s134
      %s149 = sphi 0, %s135
      %s153 = sphi 0, %s153
      %s155 = sphi 0, %s153
      %s156 = sphi 0, %s155
      %s170 = sphi 0, %s156
      %s174 = sphi 0, %s174
      %s176 = sphi 0, %s174
      %s177 = sphi 0, %s176
      %s191 = sphi 0, %s177
      %s195 = sphi 0, %s195
      %s197 = sphi 0, %s195
      %s198 = sphi 0, %s197
      %s212 = sphi 0, %s198
      %s216 = sphi 0, %s216
      %s218 = sphi 0, %s216
      %s219 = sphi 0, %s218
      %s233 = sphi 0, %s219
      %s237 = sphi 0, %s237
      %s239 = sphi 0, %s237
      %s240 = sphi 0, %s239
      %s254 = sphi 0, %s240
      %s258 = sphi 0, %s258
      %s260 = sphi 0, %s258
      %s261 = sphi 0, %s260
      %s275 = sphi 0, %s261
      %s281 = sphi 0, %s283
      %s284 = sphi 0, %s281
      %s285 = sphi 0, %s284
      %s301 = sphi 0, %s285
    $region4: #{tpu_custom_call.1} parent=1 // loop_header_branch
      %33 = sbr.rel (%p31) target = $region8
    $region5: #{tpu_custom_call.1} parent=1 // loop_body
      %s35 = ssub.s32 %s30, 1
      %s36 = ssub.s32 %s30, 2
      %s37 = sadd.s32 %s30, 1
      %s38 = ssub.s32 %s30, %s37
      %p39 = scmp.eq.s32.totalorder %s38, 0
      %s41 = sadd.s32 %s40, 1
      %s42 = scalar_select %p39, %s40, %s41
      %p45 = pneg %p39
      %p46 = scmp.eq.s32.totalorder %s30, 1
      %p47 = por %p45, %p46
      %p48 = scmp.ne.s32.totalorder %s40, %s43
      %p49 = scmp.eq.s32.totalorder %s30, 0
      %p50 = por %p48, %p49
      %p51 = scmp.ne.s32.totalorder %s40, %s43
      %p52 = scmp.eq.s32.totalorder %s35, 1
      %p53 = por %p51, %p52
      %p54 = scmp.ne.s32.totalorder %s43, %s44
      %p55 = scmp.eq.s32.totalorder %s35, 0
      %p56 = por %p54, %p55
      %p57 = scmp.ne.s32.totalorder %s43, %s44
      %p58 = scmp.eq.s32.totalorder %s36, 1
      %p59 = por %p57, %p58
      %p61 = scmp.ne.s32.totalorder %s44, %s60
      %p62 = scmp.eq.s32.totalorder %s36, 0
      %p63 = por %p61, %p62
      %s64 = ssub.s32 %s30, %s37
      %p65 = scmp.eq.s32.totalorder %s64, 0
      %s67 = sadd.s32 %s66, 1
      %s68 = scalar_select %p65, %s66, %s67
      %p71 = pneg %p65
      %p72 = scmp.eq.s32.totalorder %s30, 1
      %p73 = por %p71, %p72
      %p74 = scmp.ne.s32.totalorder %s66, %s69
      %p75 = scmp.eq.s32.totalorder %s30, 0
      %p76 = por %p74, %p75
      %p77 = scmp.ne.s32.totalorder %s66, %s69
      %p78 = scmp.eq.s32.totalorder %s35, 1
      %p79 = por %p77, %p78
      %p80 = scmp.ne.s32.totalorder %s69, %s70
      %p81 = scmp.eq.s32.totalorder %s35, 0
      %p82 = por %p80, %p81
      %p83 = scmp.ne.s32.totalorder %s69, %s70
      %p84 = scmp.eq.s32.totalorder %s36, 1
      %p85 = por %p83, %p84
      %p87 = scmp.ne.s32.totalorder %s70, %s86
      %p88 = scmp.eq.s32.totalorder %s36, 0
      %p89 = por %p87, %p88
      %s91 = sadd.s32 %s90, 1
      %p94 = scmp.eq.s32.totalorder %s30, 1
      %p95 = scmp.ne.s32.totalorder %s90, %s92
      %p96 = scmp.eq.s32.totalorder %s30, 0
      %p97 = por %p95, %p96
      %p98 = scmp.ne.s32.totalorder %s90, %s92
      %p99 = scmp.eq.s32.totalorder %s35, 1
      %p100 = por %p98, %p99
      %p101 = scmp.ne.s32.totalorder %s92, %s93
      %p102 = scmp.eq.s32.totalorder %s35, 0
      %p103 = por %p101, %p102
      %p104 = scmp.ne.s32.totalorder %s92, %s93
      %p105 = scmp.eq.s32.totalorder %s36, 1
      %p106 = por %p104, %p105
      %p108 = scmp.ne.s32.totalorder %s93, %s107
      %p109 = scmp.eq.s32.totalorder %s36, 0
      %p110 = por %p108, %p109
      %s112 = sadd.s32 %s111, 1
      %p115 = scmp.eq.s32.totalorder %s30, 1
      %p116 = scmp.ne.s32.totalorder %s111, %s113
      %p117 = scmp.eq.s32.totalorder %s30, 0
      %p118 = por %p116, %p117
      %p119 = scmp.ne.s32.totalorder %s111, %s113
      %p120 = scmp.eq.s32.totalorder %s35, 1
      %p121 = por %p119, %p120
      %p122 = scmp.ne.s32.totalorder %s113, %s114
      %p123 = scmp.eq.s32.totalorder %s35, 0
      %p124 = por %p122, %p123
      %p125 = scmp.ne.s32.totalorder %s113, %s114
      %p126 = scmp.eq.s32.totalorder %s36, 1
      %p127 = por %p125, %p126
      %p129 = scmp.ne.s32.totalorder %s114, %s128
      %p130 = scmp.eq.s32.totalorder %s36, 0
      %p131 = por %p129, %p130
      %s133 = sadd.s32 %s132, 1
      %p136 = scmp.eq.s32.totalorder %s30, 1
      %p137 = scmp.ne.s32.totalorder %s132, %s134
      %p138 = scmp.eq.s32.totalorder %s30, 0
      %p139 = por %p137, %p138
      %p140 = scmp.ne.s32.totalorder %s132, %s134
      %p141 = scmp.eq.s32.totalorder %s35, 1
      %p142 = por %p140, %p141
      %p143 = scmp.ne.s32.totalorder %s134, %s135
      %p144 = scmp.eq.s32.totalorder %s35, 0
      %p145 = por %p143, %p144
      %p146 = scmp.ne.s32.totalorder %s134, %s135
      %p147 = scmp.eq.s32.totalorder %s36, 1
      %p148 = por %p146, %p147
      %p150 = scmp.ne.s32.totalorder %s135, %s149
      %p151 = scmp.eq.s32.totalorder %s36, 0
      %p152 = por %p150, %p151
      %s154 = sadd.s32 %s153, 1
      %p157 = scmp.eq.s32.totalorder %s30, 1
      %p158 = scmp.ne.s32.totalorder %s153, %s155
      %p159 = scmp.eq.s32.totalorder %s30, 0
      %p160 = por %p158, %p159
      %p161 = scmp.ne.s32.totalorder %s153, %s155
      %p162 = scmp.eq.s32.totalorder %s35, 1
      %p163 = por %p161, %p162
      %p164 = scmp.ne.s32.totalorder %s155, %s156
      %p165 = scmp.eq.s32.totalorder %s35, 0
      %p166 = por %p164, %p165
      %p167 = scmp.ne.s32.totalorder %s155, %s156
      %p168 = scmp.eq.s32.totalorder %s36, 1
      %p169 = por %p167, %p168
      %p171 = scmp.ne.s32.totalorder %s156, %s170
      %p172 = scmp.eq.s32.totalorder %s36, 0
      %p173 = por %p171, %p172
      %s175 = sadd.s32 %s174, 1
      %p178 = scmp.eq.s32.totalorder %s30, 1
      %p179 = scmp.ne.s32.totalorder %s174, %s176
      %p180 = scmp.eq.s32.totalorder %s30, 0
      %p181 = por %p179, %p180
      %p182 = scmp.ne.s32.totalorder %s174, %s176
      %p183 = scmp.eq.s32.totalorder %s35, 1
      %p184 = por %p182, %p183
      %p185 = scmp.ne.s32.totalorder %s176, %s177
      %p186 = scmp.eq.s32.totalorder %s35, 0
      %p187 = por %p185, %p186
      %p188 = scmp.ne.s32.totalorder %s176, %s177
      %p189 = scmp.eq.s32.totalorder %s36, 1
      %p190 = por %p188, %p189
      %p192 = scmp.ne.s32.totalorder %s177, %s191
      %p193 = scmp.eq.s32.totalorder %s36, 0
      %p194 = por %p192, %p193
      %s196 = sadd.s32 %s195, 1
      %p199 = scmp.eq.s32.totalorder %s30, 1
      %p200 = scmp.ne.s32.totalorder %s195, %s197
      %p201 = scmp.eq.s32.totalorder %s30, 0
      %p202 = por %p200, %p201
      %p203 = scmp.ne.s32.totalorder %s195, %s197
      %p204 = scmp.eq.s32.totalorder %s35, 1
      %p205 = por %p203, %p204
      %p206 = scmp.ne.s32.totalorder %s197, %s198
      %p207 = scmp.eq.s32.totalorder %s35, 0
      %p208 = por %p206, %p207
      %p209 = scmp.ne.s32.totalorder %s197, %s198
      %p210 = scmp.eq.s32.totalorder %s36, 1
      %p211 = por %p209, %p210
      %p213 = scmp.ne.s32.totalorder %s198, %s212
      %p214 = scmp.eq.s32.totalorder %s36, 0
      %p215 = por %p213, %p214
      %s217 = sadd.s32 %s216, 1
      %p220 = scmp.eq.s32.totalorder %s30, 1
      %p221 = scmp.ne.s32.totalorder %s216, %s218
      %p222 = scmp.eq.s32.totalorder %s30, 0
      %p223 = por %p221, %p222
      %p224 = scmp.ne.s32.totalorder %s216, %s218
      %p225 = scmp.eq.s32.totalorder %s35, 1
      %p226 = por %p224, %p225
      %p227 = scmp.ne.s32.totalorder %s218, %s219
      %p228 = scmp.eq.s32.totalorder %s35, 0
      %p229 = por %p227, %p228
      %p230 = scmp.ne.s32.totalorder %s218, %s219
      %p231 = scmp.eq.s32.totalorder %s36, 1
      %p232 = por %p230, %p231
      %p234 = scmp.ne.s32.totalorder %s219, %s233
      %p235 = scmp.eq.s32.totalorder %s36, 0
      %p236 = por %p234, %p235
      %s238 = sadd.s32 %s237, 1
      %p241 = scmp.eq.s32.totalorder %s30, 1
      %p242 = scmp.ne.s32.totalorder %s237, %s239
      %p243 = scmp.eq.s32.totalorder %s30, 0
      %p244 = por %p242, %p243
      %p245 = scmp.ne.s32.totalorder %s237, %s239
      %p246 = scmp.eq.s32.totalorder %s35, 1
      %p247 = por %p245, %p246
      %p248 = scmp.ne.s32.totalorder %s239, %s240
      %p249 = scmp.eq.s32.totalorder %s35, 0
      %p250 = por %p248, %p249
      %p251 = scmp.ne.s32.totalorder %s239, %s240
      %p252 = scmp.eq.s32.totalorder %s36, 1
      %p253 = por %p251, %p252
      %p255 = scmp.ne.s32.totalorder %s240, %s254
      %p256 = scmp.eq.s32.totalorder %s36, 0
      %p257 = por %p255, %p256
      %s259 = sadd.s32 %s258, 1
      %p262 = scmp.eq.s32.totalorder %s30, 1
      %p263 = scmp.ne.s32.totalorder %s258, %s260
      %p264 = scmp.eq.s32.totalorder %s30, 0
      %p265 = por %p263, %p264
      %p266 = scmp.ne.s32.totalorder %s258, %s260
      %p267 = scmp.eq.s32.totalorder %s35, 1
      %p268 = por %p266, %p267
      %p269 = scmp.ne.s32.totalorder %s260, %s261
      %p270 = scmp.eq.s32.totalorder %s35, 0
      %p271 = por %p269, %p270
      %p272 = scmp.ne.s32.totalorder %s260, %s261
      %p273 = scmp.eq.s32.totalorder %s36, 1
      %p274 = por %p272, %p273
      %p276 = scmp.ne.s32.totalorder %s261, %s275
      %p277 = scmp.eq.s32.totalorder %s36, 0
      %p278 = por %p276, %p277
      %s279 = ssub.s32 %s30, %s37
      %p280 = scmp.eq.s32.totalorder %s279, 0
      %s282 = sadd.s32 %s281, 1
      %s283 = scalar_select %p280, %s281, %s282
      %p286 = pneg %p280
      %p287 = scmp.eq.s32.totalorder %s30, 1
      %p288 = por %p286, %p287
      %p289 = scmp.ne.s32.totalorder %s281, %s284
      %p290 = scmp.eq.s32.totalorder %s30, 0
      %p291 = por %p289, %p290
      %p292 = scmp.ne.s32.totalorder %s281, %s284
      %p293 = scmp.eq.s32.totalorder %s35, 1
      %p294 = por %p292, %p293
      %p295 = scmp.ne.s32.totalorder %s284, %s285
      %p296 = scmp.eq.s32.totalorder %s35, 0
      %p297 = por %p295, %p296
      %p298 = scmp.ne.s32.totalorder %s284, %s285
      %p299 = scmp.eq.s32.totalorder %s36, 1
      %p300 = por %p298, %p299
      %p302 = scmp.ne.s32.totalorder %s285, %s301
      %p303 = scmp.eq.s32.totalorder %s36, 0
      %p304 = por %p302, %p303
      %p305 = scmp.le.s32.totalorder 1, %s30
      %p306 = scmp.lt.s32.totalorder %s30, 3
      %p307 = pnand %p305, %p306
      %p308 = pneg %p307
      // Predicated region
      $region9: #{tpu_custom_call.1} parent=5 // pred_check
        _
      $region10: #{tpu_custom_call.1} parent=5 // pred_check_branch
        %310 = sbr.rel (%p307) target = $region12
      $region11: #{tpu_custom_call.1} parent=5 // pred_region
        %s311 = ssub.s32 %s30, 1
        // Predicated region
        $region13: #{tpu_custom_call.1} parent=11 // pred_check
          %p312 = pneg %p103
        $region14: #{tpu_custom_call.1} parent=11 // pred_check_branch
          %314 = sbr.rel (%p312) target = $region16
        $region15: #{tpu_custom_call.1} parent=11 // pred_region
          _
        $region16: #{tpu_custom_call.1} parent=11 // pred_fallthru
          _
        // Predicated region
        $region17: #{tpu_custom_call.1} parent=11 // pred_check
          %p315 = pneg %p124
        $region18: #{tpu_custom_call.1} parent=11 // pred_check_branch
          %317 = sbr.rel (%p315) target = $region20
        $region19: #{tpu_custom_call.1} parent=11 // pred_region
          %s319 = ssub.s32 2048, 2048
          %320 = vsyncadd [#allocation9], %s319
          %s321 = sshll.u32 [#allocation8], 4
          %s322 = int_to_ptr.vmem [resolvable:$true] %s321
          %327 = dma.hbm_to_vmem [thread:$0]  %s4, 2048, %s322, [#allocation9], 128, 128, 8
        $region20: #{tpu_custom_call.1} parent=11 // pred_fallthru
          _
        // Predicated region
        $region21: #{tpu_custom_call.1} parent=11 // pred_check
          %p328 = pneg %p145
        $region22: #{tpu_custom_call.1} parent=11 // pred_check_branch
          %330 = sbr.rel (%p328) target = $region24
        $region23: #{tpu_custom_call.1} parent=11 // pred_region
          _
        $region24: #{tpu_custom_call.1} parent=11 // pred_fallthru
          _
        // Predicated region
        $region25: #{tpu_custom_call.1} parent=11 // pred_check
          %p331 = pneg %p166
        $region26: #{tpu_custom_call.1} parent=11 // pred_check_branch
          %333 = sbr.rel (%p331) target = $region28
        $region27: #{tpu_custom_call.1} parent=11 // pred_region
          %s335 = ssub.s32 2048, 2048
          %336 = vsyncadd [#allocation9], %s335
          %s337 = sshll.u32 [#allocation10], 4
          %s338 = int_to_ptr.vmem [resolvable:$true] %s337
          %343 = dma.hbm_to_vmem [thread:$0]  %s6, 2048, %s338, [#allocation9], 128, 128, 8
        $region28: #{tpu_custom_call.1} parent=11 // pred_fallthru
          _
        // Predicated region
        $region29: #{tpu_custom_call.1} parent=11 // pred_check
          %p344 = pneg %p187
        $region30: #{tpu_custom_call.1} parent=11 // pred_check_branch
          %346 = sbr.rel (%p344) target = $region32
        $region31: #{tpu_custom_call.1} parent=11 // pred_region
          _
        $region32: #{tpu_custom_call.1} parent=11 // pred_fallthru
          _
        // Predicated region
        $region33: #{tpu_custom_call.1} parent=11 // pred_check
          %p347 = pneg %p208
        $region34: #{tpu_custom_call.1} parent=11 // pred_check_branch
          %349 = sbr.rel (%p347) target = $region36
        $region35: #{tpu_custom_call.1} parent=11 // pred_region
          %s351 = ssub.s32 2048, 2048
          %352 = vsyncadd [#allocation12], %s351
          %s353 = sshll.u32 [#allocation11], 4
          %s354 = int_to_ptr.vmem [resolvable:$true] %s353
          %359 = dma.hbm_to_vmem [thread:$0]  %s8, 2048, %s354, [#allocation12], 128, 128, 8
        $region36: #{tpu_custom_call.1} parent=11 // pred_fallthru
          _
        // Predicated region
        $region37: #{tpu_custom_call.1} parent=11 // pred_check
          %p360 = pneg %p229
        $region38: #{tpu_custom_call.1} parent=11 // pred_check_branch
          %362 = sbr.rel (%p360) target = $region40
        $region39: #{tpu_custom_call.1} parent=11 // pred_region
          _
        $region40: #{tpu_custom_call.1} parent=11 // pred_fallthru
          _
        // Predicated region
        $region41: #{tpu_custom_call.1} parent=11 // pred_check
          %p363 = pneg %p250
        $region42: #{tpu_custom_call.1} parent=11 // pred_check_branch
          %365 = sbr.rel (%p363) target = $region44
        $region43: #{tpu_custom_call.1} parent=11 // pred_region
          %s367 = ssub.s32 2048, 2048
          %368 = vsyncadd [#allocation12], %s367
          %s369 = sshll.u32 [#allocation13], 4
          %s370 = int_to_ptr.vmem [resolvable:$true] %s369
          %375 = dma.hbm_to_vmem [thread:$0]  %s10, 2048, %s370, [#allocation12], 128, 128, 8
        $region44: #{tpu_custom_call.1} parent=11 // pred_fallthru
          _
        // Predicated region
        $region45: #{tpu_custom_call.1} parent=11 // pred_check
          %p376 = pneg %p271
        $region46: #{tpu_custom_call.1} parent=11 // pred_check_branch
          %378 = sbr.rel (%p376) target = $region48
        $region47: #{tpu_custom_call.1} parent=11 // pred_region
          _
        $region48: #{tpu_custom_call.1} parent=11 // pred_fallthru
          _
      $region12: #{tpu_custom_call.1} parent=5 // pred_fallthru
        _
      %p379 = scmp.lt.s32.totalorder %s30, 2
      // Predicated region
      $region49: #{tpu_custom_call.1} parent=5 // pred_check
        %p380 = pneg %p379
      $region50: #{tpu_custom_call.1} parent=5 // pred_check_branch
        %382 = sbr.rel (%p380) target = $region52
      $region51: #{tpu_custom_call.1} parent=5 // pred_region
        // Predicated region
        $region53: #{tpu_custom_call.1} parent=51 // pred_check
          %p383 = pneg %p50
        $region54: #{tpu_custom_call.1} parent=51 // pred_check_branch
          %385 = sbr.rel (%p383) target = $region56
        $region55: #{tpu_custom_call.1} parent=51 // pred_region
          %s386 = sand.u32 %s40, 1
          %s387 = scalar_lea.sflag [#allocation6], %s386
          %s388 = sand.u32 %s40, 1
          %s389 = smul.addr %s388, 8
          %s390 = scalar_lea.vmem [#allocation5], %s389
          %s392 = ssub.s32 128, 128
          %393 = vsyncadd %s387, %s392
          %s394 = smul.addr %s30, 128
          %s395 = scalar_lea.hbm %s1, %s394
          %s397 = sshll.u32 %s390, 4
          %s398 = int_to_ptr.vmem [resolvable:$true] %s397
          %400 = dma.hbm_to_vmem [thread:$0]  %s395, 128, %s398, %s387
        $region56: #{tpu_custom_call.1} parent=51 // pred_fallthru
          _
        // Predicated region
        $region57: #{tpu_custom_call.1} parent=51 // pred_check
          %p401 = pneg %p76
        $region58: #{tpu_custom_call.1} parent=51 // pred_check_branch
          %403 = sbr.rel (%p401) target = $region60
        $region59: #{tpu_custom_call.1} parent=51 // pred_region
          %p404 = scmp.lt.s32.totalorder %s30, 1
          %s405 = scalar_select %p404, %s30, 1
          %s406 = scalar_lea.vmem %s2, %s405
        $region60: #{tpu_custom_call.1} parent=51 // pred_fallthru
          _
      $region52: #{tpu_custom_call.1} parent=5 // pred_fallthru
        _
      %p407 = scmp.le.s32.totalorder 1, %s30
      %p408 = scmp.lt.s32.totalorder %s30, 3
      %p409 = pnand %p407, %p408
      %p410 = pneg %p409
      // Predicated region
      $region61: #{tpu_custom_call.1} parent=5 // pred_check
        _
      $region62: #{tpu_custom_call.1} parent=5 // pred_check_branch
        %412 = sbr.rel (%p409) target = $region64
      $region63: #{tpu_custom_call.1} parent=5 // pred_region
        %s413 = ssub.s32 %s30, 1
        %s414 = sand.u32 %s43, 1
        %s415 = scalar_lea.sflag [#allocation6], %s414
        %s416 = sand.u32 %s43, 1
        %s417 = smul.addr %s416, 8
        %s418 = scalar_lea.vmem [#allocation5], %s417
        // Predicated region
        $region65: #{tpu_custom_call.1} parent=63 // pred_check
          %p419 = pneg %p56
        $region66: #{tpu_custom_call.1} parent=63 // pred_check_branch
          %421 = sbr.rel (%p419) target = $region68
        $region67: #{tpu_custom_call.1} parent=63 // pred_region
          %422 = dma.done %s415, 128
        $region68: #{tpu_custom_call.1} parent=63 // pred_fallthru
          _
        // Predicated region
        $region69: #{tpu_custom_call.1} parent=63 // pred_check
          %p423 = pneg %p124
        $region70: #{tpu_custom_call.1} parent=63 // pred_check_branch
          %425 = sbr.rel (%p423) target = $region72
        $region71: #{tpu_custom_call.1} parent=63 // pred_region
          %426 = dma.done [#allocation9], 2048
        $region72: #{tpu_custom_call.1} parent=63 // pred_fallthru
          _
        // Predicated region
        $region73: #{tpu_custom_call.1} parent=63 // pred_check
          %p427 = pneg %p166
        $region74: #{tpu_custom_call.1} parent=63 // pred_check_branch
          %429 = sbr.rel (%p427) target = $region76
        $region75: #{tpu_custom_call.1} parent=63 // pred_region
          %430 = dma.done [#allocation9], 2048
        $region76: #{tpu_custom_call.1} parent=63 // pred_fallthru
          _
        // Predicated region
        $region77: #{tpu_custom_call.1} parent=63 // pred_check
          %p431 = pneg %p208
        $region78: #{tpu_custom_call.1} parent=63 // pred_check_branch
          %433 = sbr.rel (%p431) target = $region80
        $region79: #{tpu_custom_call.1} parent=63 // pred_region
          %434 = dma.done [#allocation12], 2048
        $region80: #{tpu_custom_call.1} parent=63 // pred_fallthru
          _
        // Predicated region
        $region81: #{tpu_custom_call.1} parent=63 // pred_check
          %p435 = pneg %p250
        $region82: #{tpu_custom_call.1} parent=63 // pred_check_branch
          %437 = sbr.rel (%p435) target = $region84
        $region83: #{tpu_custom_call.1} parent=63 // pred_region
          %438 = dma.done [#allocation12], 2048
        $region84: #{tpu_custom_call.1} parent=63 // pred_fallthru
          _
        %s439 = sand.u32 %s43, 1
        %s440 = scalar_lea.sflag [#allocation6], %s439
        %s441 = sand.u32 %s43, 1
        %s442 = smul.addr %s441, 8
        %s443 = scalar_lea.vmem [#allocation5], %s442
        %p444 = pneg %p56
        %p445 = pneg %p53
        %p446 = scmp.lt.s32.totalorder %s35, 1
        %s447 = scalar_select %p446, %s35, 1
        %s448 = scalar_lea.vmem %s2, %s447
        %p449 = pneg %p82
        %p450 = pneg %p79
        %p451 = pneg %p103
        %p452 = pneg %p100
        %p453 = pneg %p124
        %p454 = pneg %p121
        %p455 = pneg %p145
        %p456 = pneg %p142
        %p457 = pneg %p166
        %p458 = pneg %p163
        %p459 = pneg %p187
        %p460 = pneg %p184
        %p461 = pneg %p208
        %p462 = pneg %p205
        %p463 = pneg %p229
        %p464 = pneg %p226
        %p465 = pneg %p250
        %p466 = pneg %p247
        %p467 = pneg %p271
        %p468 = pneg %p268
        %p469 = pneg %p297
        %p470 = pneg %p294
        %s471 = sand.u32 %s284, 1
        %s472 = scalar_lea.sflag [#allocation7], %s471
        %s473 = sand.u32 %s284, 1
        %s474 = smul.addr %s473, 8
        %s475 = scalar_lea.vmem [#allocation14], %s474
        %p476 = scmp.lt.s32.totalorder %s35, 1
        %s477 = scalar_select %p476, %s35, 1
        %s478 = scalar_lea.vmem %s2, %s477
        %v480 = vld [vmem:[%s418] sm:$0xff]
        %v481 = vpack.c.bf16 %v480, %v480
        %v482 = vld [vmem:[#allocation8] sm:$0xff]
        %v483 = vld [vmem:[#allocation8 + $0x8] sm:$0xff]
        %v484 = vld [vmem:[#allocation8 + $0x10] sm:$0xff]
        %v485 = vld [vmem:[#allocation8 + $0x18] sm:$0xff]
        %v486 = vld [vmem:[#allocation8 + $0x20] sm:$0xff]
        %v487 = vld [vmem:[#allocation8 + $0x28] sm:$0xff]
        %v488 = vld [vmem:[#allocation8 + $0x30] sm:$0xff]
        %v489 = vld [vmem:[#allocation8 + $0x38] sm:$0xff]
        %v490 = vld [vmem:[#allocation8 + $0x40] sm:$0xff]
        %v491 = vld [vmem:[#allocation8 + $0x48] sm:$0xff]
        %v492 = vld [vmem:[#allocation8 + $0x50] sm:$0xff]
        %v493 = vld [vmem:[#allocation8 + $0x58] sm:$0xff]
        %v494 = vld [vmem:[#allocation8 + $0x60] sm:$0xff]
        %v495 = vld [vmem:[#allocation8 + $0x68] sm:$0xff]
        %v496 = vld [vmem:[#allocation8 + $0x70] sm:$0xff]
        %v497 = vld [vmem:[#allocation8 + $0x78] sm:$0xff]
        %v498 = vpack.c.bf16 %v483, %v482
        %v499 = vpack.c.bf16 %v485, %v484
        %v500 = vpack.c.bf16 %v487, %v486
        %v501 = vpack.c.bf16 %v489, %v488
        %v502 = vpack.c.bf16 %v491, %v490
        %v503 = vpack.c.bf16 %v493, %v492
        %v504 = vpack.c.bf16 %v495, %v494
        %v505 = vpack.c.bf16 %v497, %v496
        %v506 = vld [vmem:[%s5] sm:$0x1]
        %v508 = vlaneseq
        %v509 = vshrl.u32 %v508, 7
        %v510 = vsub.s32 0, %v509
        %v511 = vrot.slane %v506, %v510
        %513 = vmatprep.subr.bf16.mxu0 0
        %514 = vmatpush1.bf16.msra.mxu0 %v498
        %515 = vmatprep.subr.bf16.mxu0 0
        %516 = vmatpush1.bf16.msra.mxu0 %v499
        %517 = vmatprep.subr.bf16.mxu0 0
        %518 = vmatpush1.bf16.msra.mxu0 %v500
        %519 = vmatprep.subr.bf16.mxu0 0
        %520 = vmatpush1.bf16.msra.mxu0 %v501
        %521 = vmatprep.subr.bf16.mxu0 0
        %522 = vmatpush1.bf16.msra.mxu0 %v502
        %523 = vmatprep.subr.bf16.mxu0 0
        %524 = vmatpush1.bf16.msra.mxu0 %v503
        %525 = vmatprep.subr.bf16.mxu0 0
        %526 = vmatpush1.bf16.msra.mxu0 %v504
        %527 = vmatprep.subr.bf16.mxu0 0
        %528 = vmatpush1.bf16.msra.mxu0 %v505
        %529 = vmatprep.subr.bf16.mxu0 0
        %530 = vmatpush1.bf16.msra.mxu0 0
        %531 = vmatprep.subr.bf16.mxu0 0
        %532 = vmatpush1.bf16.msra.mxu0 0
        %533 = vmatprep.subr.bf16.mxu0 0
        %534 = vmatpush1.bf16.msra.mxu0 0
        %535 = vmatprep.subr.bf16.mxu0 0
        %536 = vmatpush1.bf16.msra.mxu0 0
        %537 = vmatprep.subr.bf16.mxu0 0
        %538 = vmatpush1.bf16.msra.mxu0 0
        %539 = vmatprep.subr.bf16.mxu0 0
        %540 = vmatpush1.bf16.msra.mxu0 0
        %541 = vmatprep.subr.bf16.mxu0 0
        %542 = vmatpush1.bf16.msra.mxu0 0
        %543 = vmatprep.subr.bf16.mxu0 0
        %544 = vmatpush1.bf16.msra.mxu0 0
        %545 = vmatprep.mubr.bf16.mxu0 0
        %546 = vmatmul.mubr.bf16.gmra.mrb[0].mxu0 %v481
        %v547 = vpop.f32.mrb[0].mxu0
        %v548 = vadd.f32 %v511, %v547
        %v549 = vpop.f32.mrb[0].mxu0
        %v550 = vpop.f32.mrb[0].mxu0
        %v551 = vpop.f32.mrb[0].mxu0
        %552 = vdwg.mxu0
        %v553 = vld [vmem:[#allocation10] sm:$0xff]
        %v554 = vld [vmem:[#allocation10 + $0x8] sm:$0xff]
        %v555 = vld [vmem:[#allocation10 + $0x10] sm:$0xff]
        %v556 = vld [vmem:[#allocation10 + $0x18] sm:$0xff]
        %v557 = vld [vmem:[#allocation10 + $0x20] sm:$0xff]
        %v558 = vld [vmem:[#allocation10 + $0x28] sm:$0xff]
        %v559 = vld [vmem:[#allocation10 + $0x30] sm:$0xff]
        %v560 = vld [vmem:[#allocation10 + $0x38] sm:$0xff]
        %v561 = vld [vmem:[#allocation10 + $0x40] sm:$0xff]
        %v562 = vld [vmem:[#allocation10 + $0x48] sm:$0xff]
        %v563 = vld [vmem:[#allocation10 + $0x50] sm:$0xff]
        %v564 = vld [vmem:[#allocation10 + $0x58] sm:$0xff]
        %v565 = vld [vmem:[#allocation10 + $0x60] sm:$0xff]
        %v566 = vld [vmem:[#allocation10 + $0x68] sm:$0xff]
        %v567 = vld [vmem:[#allocation10 + $0x70] sm:$0xff]
        %v568 = vld [vmem:[#allocation10 + $0x78] sm:$0xff]
        %v569 = vpack.c.bf16 %v554, %v553
        %v570 = vpack.c.bf16 %v556, %v555
        %v571 = vpack.c.bf16 %v558, %v557
        %v572 = vpack.c.bf16 %v560, %v559
        %v573 = vpack.c.bf16 %v562, %v561
        %v574 = vpack.c.bf16 %v564, %v563
        %v575 = vpack.c.bf16 %v566, %v565
        %v576 = vpack.c.bf16 %v568, %v567
        %v577 = vld [vmem:[%s7] sm:$0x1]
        %v579 = vlaneseq
        %v580 = vshrl.u32 %v579, 7
        %v581 = vsub.s32 0, %v580
        %v582 = vrot.slane %v577, %v581
        %584 = vmatprep.subr.bf16.mxu0 0
        %585 = vmatpush1.bf16.msra.mxu0 %v569
        %586 = vmatprep.subr.bf16.mxu0 0
        %587 = vmatpush1.bf16.msra.mxu0 %v570
        %588 = vmatprep.subr.bf16.mxu0 0
        %589 = vmatpush1.bf16.msra.mxu0 %v571
        %590 = vmatprep.subr.bf16.mxu0 0
        %591 = vmatpush1.bf16.msra.mxu0 %v572
        %592 = vmatprep.subr.bf16.mxu0 0
        %593 = vmatpush1.bf16.msra.mxu0 %v573
        %594 = vmatprep.subr.bf16.mxu0 0
        %595 = vmatpush1.bf16.msra.mxu0 %v574
        %596 = vmatprep.subr.bf16.mxu0 0
        %597 = vmatpush1.bf16.msra.mxu0 %v575
        %598 = vmatprep.subr.bf16.mxu0 0
        %599 = vmatpush1.bf16.msra.mxu0 %v576
        %600 = vmatprep.subr.bf16.mxu0 0
        %601 = vmatpush1.bf16.msra.mxu0 0
        %602 = vmatprep.subr.bf16.mxu0 0
        %603 = vmatpush1.bf16.msra.mxu0 0
        %604 = vmatprep.subr.bf16.mxu0 0
        %605 = vmatpush1.bf16.msra.mxu0 0
        %606 = vmatprep.subr.bf16.mxu0 0
        %607 = vmatpush1.bf16.msra.mxu0 0
        %608 = vmatprep.subr.bf16.mxu0 0
        %609 = vmatpush1.bf16.msra.mxu0 0
        %610 = vmatprep.subr.bf16.mxu0 0
        %611 = vmatpush1.bf16.msra.mxu0 0
        %612 = vmatprep.subr.bf16.mxu0 0
        %613 = vmatpush1.bf16.msra.mxu0 0
        %614 = vmatprep.subr.bf16.mxu0 0
        %615 = vmatpush1.bf16.msra.mxu0 0
        %616 = vmatprep.mubr.bf16.mxu0 0
        %617 = vmatmul.mubr.bf16.gmra.mrb[0].mxu0 %v481
        %v618 = vpop.f32.mrb[0].mxu0
        %v619 = vadd.f32 %v582, %v618
        %v620 = vpop.f32.mrb[0].mxu0
        %v621 = vpop.f32.mrb[0].mxu0
        %v622 = vpop.f32.mrb[0].mxu0
        %623 = vdwg.mxu0
        %v624 = vld [vmem:[#allocation11] sm:$0xff]
        %v625 = vld [vmem:[#allocation11 + $0x8] sm:$0xff]
        %v626 = vld [vmem:[#allocation11 + $0x10] sm:$0xff]
        %v627 = vld [vmem:[#allocation11 + $0x18] sm:$0xff]
        %v628 = vld [vmem:[#allocation11 + $0x20] sm:$0xff]
        %v629 = vld [vmem:[#allocation11 + $0x28] sm:$0xff]
        %v630 = vld [vmem:[#allocation11 + $0x30] sm:$0xff]
        %v631 = vld [vmem:[#allocation11 + $0x38] sm:$0xff]
        %v632 = vld [vmem:[#allocation11 + $0x40] sm:$0xff]
        %v633 = vld [vmem:[#allocation11 + $0x48] sm:$0xff]
        %v634 = vld [vmem:[#allocation11 + $0x50] sm:$0xff]
        %v635 = vld [vmem:[#allocation11 + $0x58] sm:$0xff]
        %v636 = vld [vmem:[#allocation11 + $0x60] sm:$0xff]
        %v637 = vld [vmem:[#allocation11 + $0x68] sm:$0xff]
        %v638 = vld [vmem:[#allocation11 + $0x70] sm:$0xff]
        %v639 = vld [vmem:[#allocation11 + $0x78] sm:$0xff]
        %v640 = vpack.c.bf16 %v625, %v624
        %v641 = vpack.c.bf16 %v627, %v626
        %v642 = vpack.c.bf16 %v629, %v628
        %v643 = vpack.c.bf16 %v631, %v630
        %v644 = vpack.c.bf16 %v633, %v632
        %v645 = vpack.c.bf16 %v635, %v634
        %v646 = vpack.c.bf16 %v637, %v636
        %v647 = vpack.c.bf16 %v639, %v638
        %v648 = vld [vmem:[%s9] sm:$0x1]
        %v650 = vlaneseq
        %v651 = vshrl.u32 %v650, 7
        %v652 = vsub.s32 0, %v651
        %v653 = vrot.slane %v648, %v652
        %655 = vmatprep.subr.bf16.mxu0 0
        %656 = vmatpush1.bf16.msra.mxu0 %v640
        %657 = vmatprep.subr.bf16.mxu0 0
        %658 = vmatpush1.bf16.msra.mxu0 %v641
        %659 = vmatprep.subr.bf16.mxu0 0
        %660 = vmatpush1.bf16.msra.mxu0 %v642
        %661 = vmatprep.subr.bf16.mxu0 0
        %662 = vmatpush1.bf16.msra.mxu0 %v643
        %663 = vmatprep.subr.bf16.mxu0 0
        %664 = vmatpush1.bf16.msra.mxu0 %v644
        %665 = vmatprep.subr.bf16.mxu0 0
        %666 = vmatpush1.bf16.msra.mxu0 %v645
        %667 = vmatprep.subr.bf16.mxu0 0
        %668 = vmatpush1.bf16.msra.mxu0 %v646
        %669 = vmatprep.subr.bf16.mxu0 0
        %670 = vmatpush1.bf16.msra.mxu0 %v647
        %671 = vmatprep.subr.bf16.mxu0 0
        %672 = vmatpush1.bf16.msra.mxu0 0
        %673 = vmatprep.subr.bf16.mxu0 0
        %674 = vmatpush1.bf16.msra.mxu0 0
        %675 = vmatprep.subr.bf16.mxu0 0
        %676 = vmatpush1.bf16.msra.mxu0 0
        %677 = vmatprep.subr.bf16.mxu0 0
        %678 = vmatpush1.bf16.msra.mxu0 0
        %679 = vmatprep.subr.bf16.mxu0 0
        %680 = vmatpush1.bf16.msra.mxu0 0
        %681 = vmatprep.subr.bf16.mxu0 0
        %682 = vmatpush1.bf16.msra.mxu0 0
        %683 = vmatprep.subr.bf16.mxu0 0
        %684 = vmatpush1.bf16.msra.mxu0 0
        %685 = vmatprep.subr.bf16.mxu0 0
        %686 = vmatpush1.bf16.msra.mxu0 0
        %687 = vmatprep.mubr.bf16.mxu0 0
        %688 = vmatmul.mubr.bf16.gmra.mrb[0].mxu0 %v481
        %v689 = vpop.f32.mrb[0].mxu0
        %v690 = vadd.f32 %v653, %v689
        %v691 = vpop.f32.mrb[0].mxu0
        %v692 = vpop.f32.mrb[0].mxu0
        %v693 = vpop.f32.mrb[0].mxu0
        %694 = vdwg.mxu0
        %v695 = vld [vmem:[%s478] sm:$0x1]
        %v696 = vsub.f32 1.0, %v695
        %v697 = vmul.f32 %v696, -1e+09
        %v698 = vmul.f32 %v548, 0.17677669
        %v699 = vpack.c.bf16 %v698, %v698
        %v700 = vpack.c.bf16 %v619, %v619
        %v701 = vpack.c.bf16 %v690, %v690
        %s702 = sld [smem:[#allocation4]]
        %p703 = scmp.ne.s32.totalorder %s702, 0
        // Predicated region
        $region85: #{tpu_custom_call.1} parent=63 // pred_check
          %p704 = pneg %p703
        $region86: #{tpu_custom_call.1} parent=63 // pred_check_branch
          %706 = sbr.rel (%p704) target = $region88
        $region87: #{tpu_custom_call.1} parent=63 // pred_region
          %v708 = vlaneseq
          %v709 = vshrl.u32 %v708, 7
          %v710 = vsub.s32 0, %v709
          %v711 = vrot.slane %v697, %v710
          %vm713 = vcmask 261120
          %v715 = vsel %vm713, %v699, 0
          %v718 = vsel %vm713, %v700, 0
          %720 = vmatprep.subr.bf16.mxu0 0
          %721 = vmatpush1.bf16.xpose.msra.mxu0 %v718
          %722 = vmatprep.subr.bf16.mxu0 0
          %723 = vmatpush1.bf16.xpose.msra.mxu0 0
          %724 = vmatprep.subr.bf16.mxu0 0
          %725 = vmatpush1.bf16.xpose.msra.mxu0 0
          %726 = vmatprep.subr.bf16.mxu0 0
          %727 = vmatpush1.bf16.xpose.msra.mxu0 0
          %728 = vmatprep.subr.bf16.mxu0 0
          %729 = vmatpush1.bf16.xpose.msra.mxu0 0
          %730 = vmatprep.subr.bf16.mxu0 0
          %731 = vmatpush1.bf16.xpose.msra.mxu0 0
          %732 = vmatprep.subr.bf16.mxu0 0
          %733 = vmatpush1.bf16.xpose.msra.mxu0 0
          %734 = vmatprep.subr.bf16.mxu0 0
          %735 = vmatpush1.bf16.xpose.msra.mxu0 0
          %736 = vmatprep.subr.bf16.mxu0 0
          %737 = vmatpush1.bf16.xpose.msra.mxu0 0
          %738 = vmatprep.subr.bf16.mxu0 0
          %739 = vmatpush1.bf16.xpose.msra.mxu0 0
          %740 = vmatprep.subr.bf16.mxu0 0
          %741 = vmatpush1.bf16.xpose.msra.mxu0 0
          %742 = vmatprep.subr.bf16.mxu0 0
          %743 = vmatpush1.bf16.xpose.msra.mxu0 0
          %744 = vmatprep.subr.bf16.mxu0 0
          %745 = vmatpush1.bf16.xpose.msra.mxu0 0
          %746 = vmatprep.subr.bf16.mxu0 0
          %747 = vmatpush1.bf16.xpose.msra.mxu0 0
          %748 = vmatprep.subr.bf16.mxu0 0
          %749 = vmatpush1.bf16.xpose.msra.mxu0 0
          %750 = vmatprep.subr.bf16.mxu0 0
          %751 = vmatpush1.bf16.xpose.msra.mxu0 0
          %752 = vmatprep.mubr.bf16.mxu0 0
          %753 = vmatmul.mubr.bf16.gmra.mrb[0].mxu0 %v715
          %v754 = vpop.f32.mrb[0].mxu0
          %v755 = vadd.f32 %v711, %v754
          %v756 = vpop.f32.mrb[0].mxu0
          %v757 = vpop.f32.mrb[0].mxu0
          %v758 = vpop.f32.mrb[0].mxu0
          %759 = vdwg.mxu0
          %vm760 = vcmask 64512
          %v761 = vsel %vm760, %v755, -inf
          %762 = vmax.xlane.f32.xlu0 %v761
          %v763 = vpop.xlane.xlu0 %762
          %v764 = vsub.f32 %v755, %v763
          %v765 = vmul.f32 %v764, 1.442695
          %v766 = vpow.pop %v765
          %v767 = vsel %vm760, %v766, 0.0
          %768 = vadd.xlane.f32.xlu0 %v767
          %v769 = vpop.xlane.xlu0 %768
          %v770 = vpack.c.bf16 %v766, %v766
          %v772 = vsel %vm760, %v770, 0
          %vm774 = vcmask 1043456
          %v776 = vsel %vm774, %v701, 0
          %778 = vmatprep.subr.bf16.mxu0 0
          %779 = vmatpush1.bf16.msra.mxu0 %v776
          %780 = vmatprep.subr.bf16.mxu0 0
          %781 = vmatpush1.bf16.msra.mxu0 0
          %782 = vmatprep.subr.bf16.mxu0 0
          %783 = vmatpush1.bf16.msra.mxu0 0
          %784 = vmatprep.subr.bf16.mxu0 0
          %785 = vmatpush1.bf16.msra.mxu0 0
          %786 = vmatprep.subr.bf16.mxu0 0
          %787 = vmatpush1.bf16.msra.mxu0 0
          %788 = vmatprep.subr.bf16.mxu0 0
          %789 = vmatpush1.bf16.msra.mxu0 0
          %790 = vmatprep.subr.bf16.mxu0 0
          %791 = vmatpush1.bf16.msra.mxu0 0
          %792 = vmatprep.subr.bf16.mxu0 0
          %793 = vmatpush1.bf16.msra.mxu0 0
          %794 = vmatprep.subr.bf16.mxu0 0
          %795 = vmatpush1.bf16.msra.mxu0 0
          %796 = vmatprep.subr.bf16.mxu0 0
          %797 = vmatpush1.bf16.msra.mxu0 0
          %798 = vmatprep.subr.bf16.mxu0 0
          %799 = vmatpush1.bf16.msra.mxu0 0
          %800 = vmatprep.subr.bf16.mxu0 0
          %801 = vmatpush1.bf16.msra.mxu0 0
          %802 = vmatprep.subr.bf16.mxu0 0
          %803 = vmatpush1.bf16.msra.mxu0 0
          %804 = vmatprep.subr.bf16.mxu0 0
          %805 = vmatpush1.bf16.msra.mxu0 0
          %806 = vmatprep.subr.bf16.mxu0 0
          %807 = vmatpush1.bf16.msra.mxu0 0
          %808 = vmatprep.subr.bf16.mxu0 0
          %809 = vmatpush1.bf16.msra.mxu0 0
          %810 = vmatprep.mubr.bf16.mxu0 0
          %811 = vmatmul.mubr.bf16.gmra.mrb[0].mxu0 %v772
          %v812 = vpop.f32.mrb[0].mxu0
          %v813 = vadd.f32 0.0, %v812
          %v814 = vpop.f32.mrb[0].mxu0
          %v815 = vpop.f32.mrb[0].mxu0
          %v816 = vpop.f32.mrb[0].mxu0
          %817 = vdwg.mxu0
          %v818 = vrcp.pop %v769
          %v819 = vmul.f32 %v813, %v818
          %820 = vst.msk [vmem:[#allocation2] sm:$0xff] %vm713, %v819
        $region88: #{tpu_custom_call.1} parent=63 // pred_fallthru
          _
        %s821 = sld [smem:[#allocation4]]
        %p822 = scmp.eq.s32.totalorder %s821, 0
        // Predicated region
        $region89: #{tpu_custom_call.1} parent=63 // pred_check
          %p823 = pneg %p822
        $region90: #{tpu_custom_call.1} parent=63 // pred_check_branch
          %825 = sbr.rel (%p823) target = $region92
        $region91: #{tpu_custom_call.1} parent=63 // pred_region
          %vm826 = vcmask 261120
          %827 = vst.msk [vmem:[#allocation2] sm:$0xff] %vm826, 0.0
        $region92: #{tpu_custom_call.1} parent=63 // pred_fallthru
          _
        %s828 = sld [smem:[#allocation4 + $0x1]]
        %p829 = scmp.ne.s32.totalorder %s828, 0
        // Predicated region
        $region93: #{tpu_custom_call.1} parent=63 // pred_check
          %p830 = pneg %p829
        $region94: #{tpu_custom_call.1} parent=63 // pred_check_branch
          %832 = sbr.rel (%p830) target = $region96
        $region95: #{tpu_custom_call.1} parent=63 // pred_region
          %v834 = vlaneseq
          %v835 = vshrl.u32 %v834, 7
          %v836 = vsub.s32 0, %v835
          %v837 = vrot.slane %v697, %v836
          %840 = vrot.lane.b32.xlu0 %v699, 96
          %v841 = vpop.permute.xlu0 %840
          %843 = vrot.lane.b32.xlu0 %v700, 96
          %v844 = vpop.permute.xlu0 %843
          %vm845 = vcmask 261120
          %v847 = vsel %vm845, %v841, 0
          %v850 = vsel %vm845, %v844, 0
          %852 = vmatprep.subr.bf16.mxu0 0
          %853 = vmatpush1.bf16.xpose.msra.mxu0 %v850
          %854 = vmatprep.subr.bf16.mxu0 0
          %855 = vmatpush1.bf16.xpose.msra.mxu0 0
          %856 = vmatprep.subr.bf16.mxu0 0
          %857 = vmatpush1.bf16.xpose.msra.mxu0 0
          %858 = vmatprep.subr.bf16.mxu0 0
          %859 = vmatpush1.bf16.xpose.msra.mxu0 0
          %860 = vmatprep.subr.bf16.mxu0 0
          %861 = vmatpush1.bf16.xpose.msra.mxu0 0
          %862 = vmatprep.subr.bf16.mxu0 0
          %863 = vmatpush1.bf16.xpose.msra.mxu0 0
          %864 = vmatprep.subr.bf16.mxu0 0
          %865 = vmatpush1.bf16.xpose.msra.mxu0 0
          %866 = vmatprep.subr.bf16.mxu0 0
          %867 = vmatpush1.bf16.xpose.msra.mxu0 0
          %868 = vmatprep.subr.bf16.mxu0 0
          %869 = vmatpush1.bf16.xpose.msra.mxu0 0
          %870 = vmatprep.subr.bf16.mxu0 0
          %871 = vmatpush1.bf16.xpose.msra.mxu0 0
          %872 = vmatprep.subr.bf16.mxu0 0
          %873 = vmatpush1.bf16.xpose.msra.mxu0 0
          %874 = vmatprep.subr.bf16.mxu0 0
          %875 = vmatpush1.bf16.xpose.msra.mxu0 0
          %876 = vmatprep.subr.bf16.mxu0 0
          %877 = vmatpush1.bf16.xpose.msra.mxu0 0
          %878 = vmatprep.subr.bf16.mxu0 0
          %879 = vmatpush1.bf16.xpose.msra.mxu0 0
          %880 = vmatprep.subr.bf16.mxu0 0
          %881 = vmatpush1.bf16.xpose.msra.mxu0 0
          %882 = vmatprep.subr.bf16.mxu0 0
          %883 = vmatpush1.bf16.xpose.msra.mxu0 0
          %884 = vmatprep.mubr.bf16.mxu0 0
          %885 = vmatmul.mubr.bf16.gmra.mrb[0].mxu0 %v847
          %v886 = vpop.f32.mrb[0].mxu0
          %v887 = vadd.f32 %v837, %v886
          %v888 = vpop.f32.mrb[0].mxu0
          %v889 = vpop.f32.mrb[0].mxu0
          %v890 = vpop.f32.mrb[0].mxu0
          %891 = vdwg.mxu0
          %vm892 = vcmask 64512
          %v893 = vsel %vm892, %v887, -inf
          %894 = vmax.xlane.f32.xlu0 %v893
          %v895 = vpop.xlane.xlu0 %894
          %v896 = vsub.f32 %v887, %v895
          %v897 = vmul.f32 %v896, 1.442695
          %v898 = vpow.pop %v897
          %v899 = vsel %vm892, %v898, 0.0
          %900 = vadd.xlane.f32.xlu0 %v899
          %v901 = vpop.xlane.xlu0 %900
          %v902 = vpack.c.bf16 %v898, %v898
          %904 = vrot.lane.b32.xlu0 %v701, 96
          %v905 = vpop.permute.xlu0 %904
          %v907 = vsel %vm892, %v902, 0
          %vm909 = vcmask 1043456
          %v911 = vsel %vm909, %v905, 0
          %913 = vmatprep.subr.bf16.mxu0 0
          %914 = vmatpush1.bf16.msra.mxu0 %v911
          %915 = vmatprep.subr.bf16.mxu0 0
          %916 = vmatpush1.bf16.msra.mxu0 0
          %917 = vmatprep.subr.bf16.mxu0 0
          %918 = vmatpush1.bf16.msra.mxu0 0
          %919 = vmatprep.subr.bf16.mxu0 0
          %920 = vmatpush1.bf16.msra.mxu0 0
          %921 = vmatprep.subr.bf16.mxu0 0
          %922 = vmatpush1.bf16.msra.mxu0 0
          %923 = vmatprep.subr.bf16.mxu0 0
          %924 = vmatpush1.bf16.msra.mxu0 0
          %925 = vmatprep.subr.bf16.mxu0 0
          %926 = vmatpush1.bf16.msra.mxu0 0
          %927 = vmatprep.subr.bf16.mxu0 0
          %928 = vmatpush1.bf16.msra.mxu0 0
          %929 = vmatprep.subr.bf16.mxu0 0
          %930 = vmatpush1.bf16.msra.mxu0 0
          %931 = vmatprep.subr.bf16.mxu0 0
          %932 = vmatpush1.bf16.msra.mxu0 0
          %933 = vmatprep.subr.bf16.mxu0 0
          %934 = vmatpush1.bf16.msra.mxu0 0
          %935 = vmatprep.subr.bf16.mxu0 0
          %936 = vmatpush1.bf16.msra.mxu0 0
          %937 = vmatprep.subr.bf16.mxu0 0
          %938 = vmatpush1.bf16.msra.mxu0 0
          %939 = vmatprep.subr.bf16.mxu0 0
          %940 = vmatpush1.bf16.msra.mxu0 0
          %941 = vmatprep.subr.bf16.mxu0 0
          %942 = vmatpush1.bf16.msra.mxu0 0
          %943 = vmatprep.subr.bf16.mxu0 0
          %944 = vmatpush1.bf16.msra.mxu0 0
          %945 = vmatprep.mubr.bf16.mxu0 0
          %946 = vmatmul.mubr.bf16.gmra.mrb[0].mxu0 %v907
          %v947 = vpop.f32.mrb[0].mxu0
          %v948 = vadd.f32 0.0, %v947
          %v949 = vpop.f32.mrb[0].mxu0
          %v950 = vpop.f32.mrb[0].mxu0
          %v951 = vpop.f32.mrb[0].mxu0
          %952 = vdwg.mxu0
          %v953 = vrcp.pop %v901
          %v954 = vmul.f32 %v948, %v953
          %956 = vrot.lane.b32.xlu0 %v954, 32
          %v957 = vpop.permute.xlu0 %956
          %vm959 = vcmask 523520
          %960 = vst.msk [vmem:[#allocation2] sm:$0xff] %vm959, %v957
        $region96: #{tpu_custom_call.1} parent=63 // pred_fallthru
          _
        %s961 = sld [smem:[#allocation4 + $0x1]]
        %p962 = scmp.eq.s32.totalorder %s961, 0
        // Predicated region
        $region97: #{tpu_custom_call.1} parent=63 // pred_check
          %p963 = pneg %p962
        $region98: #{tpu_custom_call.1} parent=63 // pred_check_branch
          %965 = sbr.rel (%p963) target = $region100
        $region99: #{tpu_custom_call.1} parent=63 // pred_region
          %vm966 = vcmask 523520
          %967 = vst.msk [vmem:[#allocation2] sm:$0xff] %vm966, 0.0
        $region100: #{tpu_custom_call.1} parent=63 // pred_fallthru
          _
        %s968 = sld [smem:[#allocation4 + $0x2]]
        %p969 = scmp.ne.s32.totalorder %s968, 0
        // Predicated region
        $region101: #{tpu_custom_call.1} parent=63 // pred_check
          %p970 = pneg %p969
        $region102: #{tpu_custom_call.1} parent=63 // pred_check_branch
          %972 = sbr.rel (%p970) target = $region104
        $region103: #{tpu_custom_call.1} parent=63 // pred_region
          %v974 = vlaneseq
          %v975 = vshrl.u32 %v974, 7
          %v976 = vsub.s32 0, %v975
          %v977 = vrot.slane %v697, %v976
          %980 = vrot.lane.b32.xlu0 %v699, 64
          %v981 = vpop.permute.xlu0 %980
          %983 = vrot.lane.b32.xlu0 %v700, 64
          %v984 = vpop.permute.xlu0 %983
          %vm985 = vcmask 261120
          %v987 = vsel %vm985, %v981, 0
          %v990 = vsel %vm985, %v984, 0
          %992 = vmatprep.subr.bf16.mxu0 0
          %993 = vmatpush1.bf16.xpose.msra.mxu0 %v990
          %994 = vmatprep.subr.bf16.mxu0 0
          %995 = vmatpush1.bf16.xpose.msra.mxu0 0
          %996 = vmatprep.subr.bf16.mxu0 0
          %997 = vmatpush1.bf16.xpose.msra.mxu0 0
          %998 = vmatprep.subr.bf16.mxu0 0
          %999 = vmatpush1.bf16.xpose.msra.mxu0 0
          %1000 = vmatprep.subr.bf16.mxu0 0
          %1001 = vmatpush1.bf16.xpose.msra.mxu0 0
          %1002 = vmatprep.subr.bf16.mxu0 0
          %1003 = vmatpush1.bf16.xpose.msra.mxu0 0
          %1004 = vmatprep.subr.bf16.mxu0 0
          %1005 = vmatpush1.bf16.xpose.msra.mxu0 0
          %1006 = vmatprep.subr.bf16.mxu0 0
          %1007 = vmatpush1.bf16.xpose.msra.mxu0 0
          %1008 = vmatprep.subr.bf16.mxu0 0
          %1009 = vmatpush1.bf16.xpose.msra.mxu0 0
          %1010 = vmatprep.subr.bf16.mxu0 0
          %1011 = vmatpush1.bf16.xpose.msra.mxu0 0
          %1012 = vmatprep.subr.bf16.mxu0 0
          %1013 = vmatpush1.bf16.xpose.msra.mxu0 0
          %1014 = vmatprep.subr.bf16.mxu0 0
          %1015 = vmatpush1.bf16.xpose.msra.mxu0 0
          %1016 = vmatprep.subr.bf16.mxu0 0
          %1017 = vmatpush1.bf16.xpose.msra.mxu0 0
          %1018 = vmatprep.subr.bf16.mxu0 0
          %1019 = vmatpush1.bf16.xpose.msra.mxu0 0
          %1020 = vmatprep.subr.bf16.mxu0 0
          %1021 = vmatpush1.bf16.xpose.msra.mxu0 0
          %1022 = vmatprep.subr.bf16.mxu0 0
          %1023 = vmatpush1.bf16.xpose.msra.mxu0 0
          %1024 = vmatprep.mubr.bf16.mxu0 0
          %1025 = vmatmul.mubr.bf16.gmra.mrb[0].mxu0 %v987
          %v1026 = vpop.f32.mrb[0].mxu0
          %v1027 = vadd.f32 %v977, %v1026
          %v1028 = vpop.f32.mrb[0].mxu0
          %v1029 = vpop.f32.mrb[0].mxu0
          %v1030 = vpop.f32.mrb[0].mxu0
          %1031 = vdwg.mxu0
          %vm1032 = vcmask 64512
          %v1033 = vsel %vm1032, %v1027, -inf
          %1034 = vmax.xlane.f32.xlu0 %v1033
          %v1035 = vpop.xlane.xlu0 %1034
          %v1036 = vsub.f32 %v1027, %v1035
          %v1037 = vmul.f32 %v1036, 1.442695
          %v1038 = vpow.pop %v1037
          %v1039 = vsel %vm1032, %v1038, 0.0
          %1040 = vadd.xlane.f32.xlu0 %v1039
          %v1041 = vpop.xlane.xlu0 %1040
          %v1042 = vpack.c.bf16 %v1038, %v1038
          %1044 = vrot.lane.b32.xlu0 %v701, 64
          %v1045 = vpop.permute.xlu0 %1044
          %v1047 = vsel %vm1032, %v1042, 0
          %vm1049 = vcmask 1043456
          %v1051 = vsel %vm1049, %v1045, 0
          %1053 = vmatprep.subr.bf16.mxu0 0
          %1054 = vmatpush1.bf16.msra.mxu0 %v1051
          %1055 = vmatprep.subr.bf16.mxu0 0
          %1056 = vmatpush1.bf16.msra.mxu0 0
          %1057 = vmatprep.subr.bf16.mxu0 0
          %1058 = vmatpush1.bf16.msra.mxu0 0
          %1059 = vmatprep.subr.bf16.mxu0 0
          %1060 = vmatpush1.bf16.msra.mxu0 0
          %1061 = vmatprep.subr.bf16.mxu0 0
          %1062 = vmatpush1.bf16.msra.mxu0 0
          %1063 = vmatprep.subr.bf16.mxu0 0
          %1064 = vmatpush1.bf16.msra.mxu0 0
          %1065 = vmatprep.subr.bf16.mxu0 0
          %1066 = vmatpush1.bf16.msra.mxu0 0
          %1067 = vmatprep.subr.bf16.mxu0 0
          %1068 = vmatpush1.bf16.msra.mxu0 0
          %1069 = vmatprep.subr.bf16.mxu0 0
          %1070 = vmatpush1.bf16.msra.mxu0 0
          %1071 = vmatprep.subr.bf16.mxu0 0
          %1072 = vmatpush1.bf16.msra.mxu0 0
          %1073 = vmatprep.subr.bf16.mxu0 0
          %1074 = vmatpush1.bf16.msra.mxu0 0
          %1075 = vmatprep.subr.bf16.mxu0 0
          %1076 = vmatpush1.bf16.msra.mxu0 0
          %1077 = vmatprep.subr.bf16.mxu0 0
          %1078 = vmatpush1.bf16.msra.mxu0 0
          %1079 = vmatprep.subr.bf16.mxu0 0
          %1080 = vmatpush1.bf16.msra.mxu0 0
          %1081 = vmatprep.subr.bf16.mxu0 0
          %1082 = vmatpush1.bf16.msra.mxu0 0
          %1083 = vmatprep.subr.bf16.mxu0 0
          %1084 = vmatpush1.bf16.msra.mxu0 0
          %1085 = vmatprep.mubr.bf16.mxu0 0
          %1086 = vmatmul.mubr.bf16.gmra.mrb[0].mxu0 %v1047
          %v1087 = vpop.f32.mrb[0].mxu0
          %v1088 = vadd.f32 0.0, %v1087
          %v1089 = vpop.f32.mrb[0].mxu0
          %v1090 = vpop.f32.mrb[0].mxu0
          %v1091 = vpop.f32.mrb[0].mxu0
          %1092 = vdwg.mxu0
          %v1093 = vrcp.pop %v1041
          %v1094 = vmul.f32 %v1088, %v1093
          %1096 = vrot.lane.b32.xlu0 %v1094, 64
          %v1097 = vpop.permute.xlu0 %1096
          %vm1099 = vcmask 785920
          %1100 = vst.msk [vmem:[#allocation2] sm:$0xff] %vm1099, %v1097
        $region104: #{tpu_custom_call.1} parent=63 // pred_fallthru
          _
        %s1101 = sld [smem:[#allocation4 + $0x2]]
        %p1102 = scmp.eq.s32.totalorder %s1101, 0
        // Predicated region
        $region105: #{tpu_custom_call.1} parent=63 // pred_check
          %p1103 = pneg %p1102
        $region106: #{tpu_custom_call.1} parent=63 // pred_check_branch
          %1105 = sbr.rel (%p1103) target = $region108
        $region107: #{tpu_custom_call.1} parent=63 // pred_region
          %vm1106 = vcmask 785920
          %1107 = vst.msk [vmem:[#allocation2] sm:$0xff] %vm1106, 0.0
        $region108: #{tpu_custom_call.1} parent=63 // pred_fallthru
          _
        %s1108 = sld [smem:[#allocation4 + $0x3]]
        %p1109 = scmp.ne.s32.totalorder %s1108, 0
        // Predicated region
        $region109: #{tpu_custom_call.1} parent=63 // pred_check
          %p1110 = pneg %p1109
        $region110: #{tpu_custom_call.1} parent=63 // pred_check_branch
          %1112 = sbr.rel (%p1110) target = $region112
        $region111: #{tpu_custom_call.1} parent=63 // pred_region
          %v1114 = vlaneseq
          %v1115 = vshrl.u32 %v1114, 7
          %v1116 = vsub.s32 0, %v1115
          %v1117 = vrot.slane %v697, %v1116
          %1120 = vrot.lane.b32.xlu0 %v699, 32
          %v1121 = vpop.permute.xlu0 %1120
          %1123 = vrot.lane.b32.xlu0 %v700, 32
          %v1124 = vpop.permute.xlu0 %1123
          %vm1125 = vcmask 261120
          %v1127 = vsel %vm1125, %v1121, 0
          %v1130 = vsel %vm1125, %v1124, 0
          %1132 = vmatprep.subr.bf16.mxu0 0
          %1133 = vmatpush1.bf16.xpose.msra.mxu0 %v1130
          %1134 = vmatprep.subr.bf16.mxu0 0
          %1135 = vmatpush1.bf16.xpose.msra.mxu0 0
          %1136 = vmatprep.subr.bf16.mxu0 0
          %1137 = vmatpush1.bf16.xpose.msra.mxu0 0
          %1138 = vmatprep.subr.bf16.mxu0 0
          %1139 = vmatpush1.bf16.xpose.msra.mxu0 0
          %1140 = vmatprep.subr.bf16.mxu0 0
          %1141 = vmatpush1.bf16.xpose.msra.mxu0 0
          %1142 = vmatprep.subr.bf16.mxu0 0
          %1143 = vmatpush1.bf16.xpose.msra.mxu0 0
          %1144 = vmatprep.subr.bf16.mxu0 0
          %1145 = vmatpush1.bf16.xpose.msra.mxu0 0
          %1146 = vmatprep.subr.bf16.mxu0 0
          %1147 = vmatpush1.bf16.xpose.msra.mxu0 0
          %1148 = vmatprep.subr.bf16.mxu0 0
          %1149 = vmatpush1.bf16.xpose.msra.mxu0 0
          %1150 = vmatprep.subr.bf16.mxu0 0
          %1151 = vmatpush1.bf16.xpose.msra.mxu0 0
          %1152 = vmatprep.subr.bf16.mxu0 0
          %1153 = vmatpush1.bf16.xpose.msra.mxu0 0
          %1154 = vmatprep.subr.bf16.mxu0 0
          %1155 = vmatpush1.bf16.xpose.msra.mxu0 0
          %1156 = vmatprep.subr.bf16.mxu0 0
          %1157 = vmatpush1.bf16.xpose.msra.mxu0 0
          %1158 = vmatprep.subr.bf16.mxu0 0
          %1159 = vmatpush1.bf16.xpose.msra.mxu0 0
          %1160 = vmatprep.subr.bf16.mxu0 0
          %1161 = vmatpush1.bf16.xpose.msra.mxu0 0
          %1162 = vmatprep.subr.bf16.mxu0 0
          %1163 = vmatpush1.bf16.xpose.msra.mxu0 0
          %1164 = vmatprep.mubr.bf16.mxu0 0
          %1165 = vmatmul.mubr.bf16.gmra.mrb[0].mxu0 %v1127
          %v1166 = vpop.f32.mrb[0].mxu0
          %v1167 = vadd.f32 %v1117, %v1166
          %v1168 = vpop.f32.mrb[0].mxu0
          %v1169 = vpop.f32.mrb[0].mxu0
          %v1170 = vpop.f32.mrb[0].mxu0
          %1171 = vdwg.mxu0
          %vm1172 = vcmask 64512
          %v1173 = vsel %vm1172, %v1167, -inf
          %1174 = vmax.xlane.f32.xlu0 %v1173
          %v1175 = vpop.xlane.xlu0 %1174
          %v1176 = vsub.f32 %v1167, %v1175
          %v1177 = vmul.f32 %v1176, 1.442695
          %v1178 = vpow.pop %v1177
          %v1179 = vsel %vm1172, %v1178, 0.0
          %1180 = vadd.xlane.f32.xlu0 %v1179
          %v1181 = vpop.xlane.xlu0 %1180
          %v1182 = vpack.c.bf16 %v1178, %v1178
          %1184 = vrot.lane.b32.xlu0 %v701, 32
          %v1185 = vpop.permute.xlu0 %1184
          %v1187 = vsel %vm1172, %v1182, 0
          %vm1189 = vcmask 1043456
          %v1191 = vsel %vm1189, %v1185, 0
          %1193 = vmatprep.subr.bf16.mxu0 0
          %1194 = vmatpush1.bf16.msra.mxu0 %v1191
          %1195 = vmatprep.subr.bf16.mxu0 0
          %1196 = vmatpush1.bf16.msra.mxu0 0
          %1197 = vmatprep.subr.bf16.mxu0 0
          %1198 = vmatpush1.bf16.msra.mxu0 0
          %1199 = vmatprep.subr.bf16.mxu0 0
          %1200 = vmatpush1.bf16.msra.mxu0 0
          %1201 = vmatprep.subr.bf16.mxu0 0
          %1202 = vmatpush1.bf16.msra.mxu0 0
          %1203 = vmatprep.subr.bf16.mxu0 0
          %1204 = vmatpush1.bf16.msra.mxu0 0
          %1205 = vmatprep.subr.bf16.mxu0 0
          %1206 = vmatpush1.bf16.msra.mxu0 0
          %1207 = vmatprep.subr.bf16.mxu0 0
          %1208 = vmatpush1.bf16.msra.mxu0 0
          %1209 = vmatprep.subr.bf16.mxu0 0
          %1210 = vmatpush1.bf16.msra.mxu0 0
          %1211 = vmatprep.subr.bf16.mxu0 0
          %1212 = vmatpush1.bf16.msra.mxu0 0
          %1213 = vmatprep.subr.bf16.mxu0 0
          %1214 = vmatpush1.bf16.msra.mxu0 0
          %1215 = vmatprep.subr.bf16.mxu0 0
          %1216 = vmatpush1.bf16.msra.mxu0 0
          %1217 = vmatprep.subr.bf16.mxu0 0
          %1218 = vmatpush1.bf16.msra.mxu0 0
          %1219 = vmatprep.subr.bf16.mxu0 0
          %1220 = vmatpush1.bf16.msra.mxu0 0
          %1221 = vmatprep.subr.bf16.mxu0 0
          %1222 = vmatpush1.bf16.msra.mxu0 0
          %1223 = vmatprep.subr.bf16.mxu0 0
          %1224 = vmatpush1.bf16.msra.mxu0 0
          %1225 = vmatprep.mubr.bf16.mxu0 0
          %1226 = vmatmul.mubr.bf16.gmra.mrb[0].mxu0 %v1187
          %v1227 = vpop.f32.mrb[0].mxu0
          %v1228 = vadd.f32 0.0, %v1227
          %v1229 = vpop.f32.mrb[0].mxu0
          %v1230 = vpop.f32.mrb[0].mxu0
          %v1231 = vpop.f32.mrb[0].mxu0
          %1232 = vdwg.mxu0
          %v1233 = vrcp.pop %v1181
          %v1234 = vmul.f32 %v1228, %v1233
          %1236 = vrot.lane.b32.xlu0 %v1234, 96
          %v1237 = vpop.permute.xlu0 %1236
          %vm1239 = vcmask 1048320
          %1240 = vst.msk [vmem:[#allocation2] sm:$0xff] %vm1239, %v1237
        $region112: #{tpu_custom_call.1} parent=63 // pred_fallthru
          _
        %s1241 = sld [smem:[#allocation4 + $0x3]]
        %p1242 = scmp.eq.s32.totalorder %s1241, 0
        // Predicated region
        $region113: #{tpu_custom_call.1} parent=63 // pred_check
          %p1243 = pneg %p1242
        $region114: #{tpu_custom_call.1} parent=63 // pred_check_branch
          %1245 = sbr.rel (%p1243) target = $region116
        $region115: #{tpu_custom_call.1} parent=63 // pred_region
          %vm1246 = vcmask 1048320
          %1247 = vst.msk [vmem:[#allocation2] sm:$0xff] %vm1246, 0.0
        $region116: #{tpu_custom_call.1} parent=63 // pred_fallthru
          _
        %v1248 = vld [vmem:[#allocation2] sm:$0xff]
        %v1249 = vld [vmem:[%s3] sm:$0x1]
        %v1251 = vlaneseq
        %v1252 = vshrl.u32 %v1251, 7
        %v1253 = vsub.s32 0, %v1252
        %v1254 = vrot.slane %v1249, %v1253
        %v1256 = vmul.f32 %v1248, %v1254
        %v1257 = vpack.c.bf16 %v1256, %v1256
        %v1258 = vld [vmem:[#allocation13] sm:$0xff]
        %v1259 = vld [vmem:[#allocation13 + $0x8] sm:$0xff]
        %v1260 = vld [vmem:[#allocation13 + $0x10] sm:$0xff]
        %v1261 = vld [vmem:[#allocation13 + $0x18] sm:$0xff]
        %v1262 = vld [vmem:[#allocation13 + $0x20] sm:$0xff]
        %v1263 = vld [vmem:[#allocation13 + $0x28] sm:$0xff]
        %v1264 = vld [vmem:[#allocation13 + $0x30] sm:$0xff]
        %v1265 = vld [vmem:[#allocation13 + $0x38] sm:$0xff]
        %v1266 = vld [vmem:[#allocation13 + $0x40] sm:$0xff]
        %v1267 = vld [vmem:[#allocation13 + $0x48] sm:$0xff]
        %v1268 = vld [vmem:[#allocation13 + $0x50] sm:$0xff]
        %v1269 = vld [vmem:[#allocation13 + $0x58] sm:$0xff]
        %v1270 = vld [vmem:[#allocation13 + $0x60] sm:$0xff]
        %v1271 = vld [vmem:[#allocation13 + $0x68] sm:$0xff]
        %v1272 = vld [vmem:[#allocation13 + $0x70] sm:$0xff]
        %v1273 = vld [vmem:[#allocation13 + $0x78] sm:$0xff]
        %v1274 = vpack.c.bf16 %v1259, %v1258
        %v1275 = vpack.c.bf16 %v1261, %v1260
        %v1276 = vpack.c.bf16 %v1263, %v1262
        %v1277 = vpack.c.bf16 %v1265, %v1264
        %v1278 = vpack.c.bf16 %v1267, %v1266
        %v1279 = vpack.c.bf16 %v1269, %v1268
        %v1280 = vpack.c.bf16 %v1271, %v1270
        %v1281 = vpack.c.bf16 %v1273, %v1272
        %v1282 = vld [vmem:[%s11] sm:$0x1]
        %v1284 = vlaneseq
        %v1285 = vshrl.u32 %v1284, 7
        %v1286 = vsub.s32 0, %v1285
        %v1287 = vrot.slane %v1282, %v1286
        %1289 = vmatprep.subr.bf16.mxu0 0
        %1290 = vmatpush1.bf16.msra.mxu0 %v1274
        %1291 = vmatprep.subr.bf16.mxu0 0
        %1292 = vmatpush1.bf16.msra.mxu0 %v1275
        %1293 = vmatprep.subr.bf16.mxu0 0
        %1294 = vmatpush1.bf16.msra.mxu0 %v1276
        %1295 = vmatprep.subr.bf16.mxu0 0
        %1296 = vmatpush1.bf16.msra.mxu0 %v1277
        %1297 = vmatprep.subr.bf16.mxu0 0
        %1298 = vmatpush1.bf16.msra.mxu0 %v1278
        %1299 = vmatprep.subr.bf16.mxu0 0
        %1300 = vmatpush1.bf16.msra.mxu0 %v1279
        %1301 = vmatprep.subr.bf16.mxu0 0
        %1302 = vmatpush1.bf16.msra.mxu0 %v1280
        %1303 = vmatprep.subr.bf16.mxu0 0
        %1304 = vmatpush1.bf16.msra.mxu0 %v1281
        %1305 = vmatprep.subr.bf16.mxu0 0
        %1306 = vmatpush1.bf16.msra.mxu0 0
        %1307 = vmatprep.subr.bf16.mxu0 0
        %1308 = vmatpush1.bf16.msra.mxu0 0
        %1309 = vmatprep.subr.bf16.mxu0 0
        %1310 = vmatpush1.bf16.msra.mxu0 0
        %1311 = vmatprep.subr.bf16.mxu0 0
        %1312 = vmatpush1.bf16.msra.mxu0 0
        %1313 = vmatprep.subr.bf16.mxu0 0
        %1314 = vmatpush1.bf16.msra.mxu0 0
        %1315 = vmatprep.subr.bf16.mxu0 0
        %1316 = vmatpush1.bf16.msra.mxu0 0
        %1317 = vmatprep.subr.bf16.mxu0 0
        %1318 = vmatpush1.bf16.msra.mxu0 0
        %1319 = vmatprep.subr.bf16.mxu0 0
        %1320 = vmatpush1.bf16.msra.mxu0 0
        %1321 = vmatprep.mubr.bf16.mxu0 0
        %1322 = vmatmul.mubr.bf16.gmra.mrb[0].mxu0 %v1257
        %v1323 = vpop.f32.mrb[0].mxu0
        %v1324 = vadd.f32 %v1287, %v1323
        %v1325 = vpop.f32.mrb[0].mxu0
        %v1326 = vpop.f32.mrb[0].mxu0
        %v1327 = vpop.f32.mrb[0].mxu0
        %1328 = vdwg.mxu0
        %v1329 = vadd.f32 %v480, %v1324
        %1330 = vst [vmem:[%s475] sm:$0xff] %v1329
        %s1331 = sand.u32 %s284, 1
        %s1332 = scalar_lea.sflag [#allocation7], %s1331
        %s1333 = sand.u32 %s284, 1
        %s1334 = smul.addr %s1333, 8
        %s1335 = scalar_lea.vmem [#allocation14], %s1334
        // Predicated region
        $region117: #{tpu_custom_call.1} parent=63 // pred_check
          %p1336 = pneg %p294
        $region118: #{tpu_custom_call.1} parent=63 // pred_check_branch
          %1338 = sbr.rel (%p1336) target = $region120
        $region119: #{tpu_custom_call.1} parent=63 // pred_region
          %s1340 = ssub.s32 128, 128
          %1341 = vsyncadd %s1332, %s1340
          %s1342 = smul.addr %s35, 128
          %s1343 = scalar_lea.hbm %s12, %s1342
          %s1345 = sshll.u32 %s1335, 4
          %s1346 = int_to_ptr.vmem [resolvable:$true] %s1345
          %1348 = dma.vmem_to_hbm [thread:$0]  %s1346, 128, %s1343, %s1332
        $region120: #{tpu_custom_call.1} parent=63 // pred_fallthru
          _
      $region64: #{tpu_custom_call.1} parent=5 // pred_fallthru
        _
      %p1349 = scmp.le.s32.totalorder 2, %s30
      // Predicated region
      $region121: #{tpu_custom_call.1} parent=5 // pred_check
        %p1350 = pneg %p1349
      $region122: #{tpu_custom_call.1} parent=5 // pred_check_branch
        %1352 = sbr.rel (%p1350) target = $region124
      $region123: #{tpu_custom_call.1} parent=5 // pred_region
        %s1353 = ssub.s32 %s30, 2
        // Predicated region
        $region125: #{tpu_custom_call.1} parent=123 // pred_check
          %p1354 = pneg %p300
        $region126: #{tpu_custom_call.1} parent=123 // pred_check_branch
          %1356 = sbr.rel (%p1354) target = $region128
        $region127: #{tpu_custom_call.1} parent=123 // pred_region
          %s1357 = sand.u32 %s285, 1
          %s1358 = scalar_lea.sflag [#allocation7], %s1357
          %s1359 = sand.u32 %s285, 1
          %s1360 = smul.addr %s1359, 8
          %s1361 = scalar_lea.vmem [#allocation14], %s1360
          %1362 = dma.done %s1358, 128
        $region128: #{tpu_custom_call.1} parent=123 // pred_fallthru
          _
      $region124: #{tpu_custom_call.1} parent=5 // pred_fallthru
        _
    $region6: #{tpu_custom_call.1} parent=1 // loop_footer
      %s34 = sadd.s32 1, %s30
    $region7: #{tpu_custom_call.1} parent=1 // loop_footer_branch
      %29 = sbr.rel target = $region3
    $region8: #{tpu_custom_call.1} parent=1 // loop_exit
      _
    %1363 = vsyncpa [#allocation6], 1
    %s1364 = scalar_lea.sflag [#allocation6], 1
    %1365 = vsyncpa %s1364, 1
    %1366 = vsyncpa [#allocation9], 1
    %1367 = vsyncpa [#allocation12], 1
    %1368 = vsyncpa [#allocation7], 1
    %s1369 = scalar_lea.sflag [#allocation7], 1
    %1370 = vsyncpa %s1369, 1

</llo_original>
